<compile_context>
chip_gen: v7x
topology: tpu7x:2x2x1
jax: 0.10.0
libtpu: 0.0.40
codegen_flags: <defaults>
</compile_context>

<pallas_src>
import math
import functools

import jax
import jax.numpy as jnp
from jax.experimental import pallas as pl
from jax.experimental.pallas import tpu as pltpu


def _layer_norm_f32(y, gamma, beta, eps):
    # Two-pass (centered) variance: matches nn.LayerNorm and avoids the
    # E[x^2]-mu^2 cancellation issue.
    mu = jnp.mean(y, axis=-1, keepdims=True)
    yc = y - mu
    var = jnp.mean(yc * yc, axis=-1, keepdims=True)
    return yc * jax.lax.rsqrt(var + eps) * gamma + beta


def _encoder_layer_kernel(
    x_ref,                       # (1, tq, D)       f32  (residual input tile)
    q_ref,                       # (1, H, tq, hd)   bf16 (pre-scaled by 1/sqrt(hd))
    k_ref,                       # (1, H, S, hd)    bf16
    v_ref,                       # (1, H, S, hd)    bf16
    wo_ref, bo_ref,              # (H, hd, D) bf16, (1, D) f32
    g1_ref, beta1_ref,           # (1, D) f32
    w1_ref, b1_ref,              # (D, FF) bf16, (1, FF) f32
    w2_ref, b2_ref,              # (FF, D) bf16, (1, D)  f32
    g2_ref, beta2_ref,           # (1, D) f32
    o_ref,                       # (1, tq, D) f32
    *, eps,
):
    x = x_ref[0]                                      # (tq, D)    f32
    q = q_ref[0]                                      # (H, tq, hd) bf16
    k = k_ref[0]                                      # (H, S,  hd) bf16
    v = v_ref[0]                                      # (H, S,  hd) bf16
    nhead = q.shape[0]

    # ---- batched multi-head attention (one dot_general per stage, batched
    #      over the head axis; f32 accumulation, bf16 MXU operands).
    s = jnp.einsum("hqd,hkd->hqk", q, k,
                   preferred_element_type=jnp.float32)          # (H, tq, S)
    s = s - jnp.max(s, axis=-1, keepdims=True)
    p = jnp.exp(s)
    inv = pl.reciprocal(jnp.sum(p, axis=-1, keepdims=True), approx=True)
    p = (p * inv).astype(jnp.bfloat16)
    ctx = jnp.einsum("hqk,hkd->hqd", p, v,
                     preferred_element_type=jnp.float32)        # (H, tq, hd)
    ctx = ctx.astype(jnp.bfloat16)                    # single cast, once

    # ---- head merge + output projection: accumulate into one lane-dense
    #      (tq, D) f32 value; only leading-axis (head) slices are taken.
    attn = jnp.zeros(x.shape, jnp.float32)
    for h in range(nhead):                            # static, small loop
        attn = attn + jnp.dot(ctx[h], wo_ref[h],
                              preferred_element_type=jnp.float32)
    attn = attn + bo_ref[...]

    # ---- residual + LayerNorm1 (f32 elementwise) ----
    h1 = _layer_norm_f32(x + attn, g1_ref[...], beta1_ref[...], eps)

    # ---- feed-forward: linear1 -> ReLU -> linear2 (bf16 MXU, f32 acc) ----
    f = jnp.dot(h1.astype(jnp.bfloat16), w1_ref[...],
                preferred_element_type=jnp.float32) + b1_ref[...]
    f = jnp.maximum(f, 0.0)
    f = jnp.dot(f.astype(jnp.bfloat16), w2_ref[...],
                preferred_element_type=jnp.float32) + b2_ref[...]

    # ---- residual + LayerNorm2, single full-width store ----
    h2 = _layer_norm_f32(h1 + f, g2_ref[...], beta2_ref[...], eps)
    o_ref[0] = h2.astype(o_ref.dtype)


def _pick_q_tile(S, max_tile=256):
    """Largest divisor of S <= max_tile, preferring MXU-friendly multiples."""
    if S <= max_tile:
        return S
    for pref in (256, 128, 8):
        t = (max_tile // pref) * pref
        while t >= pref:
            if S % t == 0:
                return t
            t -= pref
    # TODO(synk): pad S to a tileable length instead of falling back to one
    # (possibly huge) tile for prime-ish sequence lengths.
    return S


def transformer_encoder_layer(src, params, nhead, q_tile=None,
                              batch_first=False, eps=1e-5):
    """src: (S, B, D) f32 (PyTorch layout) or (B, S, D) if batch_first=True."""
    x = src if batch_first else jnp.transpose(src, (1, 0, 2))   # (B, S, D)
    B, S, D = x.shape
    FF = params["w1"].shape[1]
    hd = D // nhead
    scale = 1.0 / math.sqrt(hd)

    tq = q_tile if q_tile is not None else _pick_q_tile(S)
    assert S % tq == 0 and (tq == S or tq % 8 == 0)
    nq = S // tq

    row = lambda v: v.reshape(1, -1).astype(jnp.float32)
    bf16 = lambda w: w.astype(jnp.bfloat16)

    # ---- QKV projection: one fused (B*S, D) x (D, 3D) XLA pass, done once.
    #      1/sqrt(hd) folded into the Q weights/bias at prep time.
    wqkv = bf16(jnp.concatenate(
        [params["wq"] * scale, params["wk"], params["wv"]], axis=1))
    bqkv = jnp.concatenate(
        [params["bq"] * scale, params["bk"], params["bv"]]).astype(jnp.float32)
    qkv = jnp.einsum("bsd,de->bse", x.astype(jnp.bfloat16), wqkv,
                     preferred_element_type=jnp.float32) + bqkv
    qkv = qkv.reshape(B, S, 3, nhead, hd).transpose(2, 0, 3, 1, 4)  # (3,B,H,S,hd)
    qh, kh, vh = (qkv[i].astype(jnp.bfloat16) for i in range(3))

    # Output projection reshaped per head: attn @ wo == sum_h ctx[h] @ wo_h[h].
    wo_heads = bf16(params["wo"]).reshape(nhead, hd, D)

    weight_args = (
        wo_heads, row(params["bo"]),
        row(params["ln1_g"]), row(params["ln1_b"]),
        bf16(params["w1"]), row(params["b1"]),
        bf16(params["w2"]), row(params["b2"]),
        row(params["ln2_g"]), row(params["ln2_b"]),
    )

    def const_spec(a):
        nd = a.ndim
        return pl.BlockSpec(a.shape, lambda b, qi, _nd=nd: (0,) * _nd)

    in_specs = [
        pl.BlockSpec((1, tq, D), lambda b, qi: (b, qi, 0)),             # x
        pl.BlockSpec((1, nhead, tq, hd), lambda b, qi: (b, 0, qi, 0)),  # q
        pl.BlockSpec((1, nhead, S, hd), lambda b, qi: (b, 0, 0, 0)),    # k
        pl.BlockSpec((1, nhead, S, hd), lambda b, qi: (b, 0, 0, 0)),    # v
    ] + [const_spec(a) for a in weight_args]
    out_specs = pl.BlockSpec((1, tq, D), lambda b, qi: (b, qi, 0))

    # ---- VMEM budget: actual requirement (double-buffered blocks + weights +
    #      live intermediates) capped at 3/4 of the chip's physical VMEM.
    F32, BF = 4, 2
    block_bytes = (tq * D * F32                 # x tile
                   + nhead * tq * hd * BF       # q tile
                   + 2 * nhead * S * hd * BF    # k, v
                   + tq * D * F32)              # out tile
    weight_bytes = sum(int(a.size) * a.dtype.itemsize for a in weight_args)
    interm_bytes = (nhead * tq * S * F32        # f32 scores/probs
                    + tq * FF * F32             # FFN activation
                    + 4 * tq * D * F32)         # attn / h1 / f / h2
    needed = 2 * block_bytes + 2 * weight_bytes + 2 * interm_bytes + (4 << 20)
    try:
        cap = int(getattr(pltpu.get_tpu_info(), "vmem_capacity_bytes",
                          128 << 20))
    except Exception:                            # pragma: no cover
        cap = 128 << 20
    vmem_limit = max(32 << 20, min(int(needed), (cap * 3) // 4))

    # ---- advisory cost estimate (kernel-only; QKV projection runs in XLA).
    flops = B * S * (4 * S * D + 2 * D * D + 4 * D * FF)
    act_bytes = B * S * D * (F32 + 3 * BF + F32)     # x in, q/k/v in, out
    cost = pl.CostEstimate(flops=int(flops),
                           transcendentals=int(B * nhead * S * S),
                           bytes_accessed=int(act_bytes + weight_bytes))

    kernel = functools.partial(_encoder_layer_kernel, eps=eps)

    y = pl.pallas_call(
        kernel,
        out_shape=jax.ShapeDtypeStruct((B, S, D), src.dtype),
        grid_spec=pltpu.PrefetchScalarGridSpec(
            num_scalar_prefetch=0,
            grid=(B, nq),
            in_specs=in_specs,
            out_specs=out_specs,
        ),
        compiler_params=pltpu.CompilerParams(
            dimension_semantics=("parallel", "parallel"),
            vmem_limit_bytes=int(vmem_limit),
        ),
        cost_estimate=cost,
    )(x, qh, kh, vh, *weight_args)

    return y if batch_first else jnp.transpose(y, (1, 0, 2))


def init_params(key, d_model, nhead, dim_feedforward):
    keys = jax.random.split(key, 12)
    w = lambda k, shape, s=0.05: (s * jax.random.normal(k, shape)).astype(jnp.float32)
    return dict(
        wq=w(keys[0], (d_model, d_model)),
        wk=w(keys[1], (d_model, d_model)),
        wv=w(keys[2], (d_model, d_model)),
        bq=w(keys[3], (d_model,)),
        bk=w(keys[4], (d_model,)),
        bv=w(keys[5], (d_model,)),
        wo=w(keys[6], (d_model, d_model)),
        bo=w(keys[7], (d_model,)),
        ln1_g=jnp.ones((d_model,), jnp.float32),
        ln1_b=jnp.zeros((d_model,), jnp.float32),
        ln2_g=jnp.ones((d_model,), jnp.float32),
        ln2_b=jnp.zeros((d_model,), jnp.float32),
        w1=w(keys[8], (d_model, dim_feedforward)),
        b1=w(keys[9], (dim_feedforward,)),
        w2=w(keys[10], (dim_feedforward, d_model)),
        b2=w(keys[11], (d_model,)),
    )


def reference(src, params, nhead, eps=1e-5):
    """Pure-JAX f32 reference matching PyTorch semantics (eval mode, no masks)."""
    S, B, D = src.shape
    hd = D // nhead
    x = src
    q = x @ params["wq"] + params["bq"]
    k = x @ params["wk"] + params["bk"]
    v = x @ params["wv"] + params["bv"]
    q = q.reshape(S, B, nhead, hd)
    k = k.reshape(S, B, nhead, hd)
    v = v.reshape(S, B, nhead, hd)
    scores = jnp.einsum("sbhd,tbhd->bhst", q, k) / math.sqrt(hd)
    p = jax.nn.softmax(scores, axis=-1)
    attn = jnp.einsum("bhst,tbhd->sbhd", p, v).reshape(S, B, D)
    attn = attn @ params["wo"] + params["bo"]

    def ln(y, g, b):
        mu = jnp.mean(y, axis=-1, keepdims=True)
        var = jnp.mean((y - mu) ** 2, axis=-1, keepdims=True)
        return (y - mu) * jax.lax.rsqrt(var + eps) * g + b

    h1 = ln(x + attn, params["ln1_g"], params["ln1_b"])
    f = jnp.maximum(h1 @ params["w1"] + params["b1"], 0.0) @ params["w2"] + params["b2"]
    return ln(h1 + f, params["ln2_g"], params["ln2_b"])


if __name__ == "__main__":
    key = jax.random.PRNGKey(0)

    # Case 1: single query tile (tq == S).
    S, B, D, H, FF = 8, 2, 32, 4, 64
    kx, kp = jax.random.split(key)
    src = jax.random.normal(kx, (S, B, D), dtype=jnp.float32)
    params = init_params(kp, D, H, FF)
    out = jax.block_until_ready(transformer_encoder_layer(src, params, H))
    ref = reference(src, params, H)
    assert out.shape == (S, B, D)
    err1 = float(jnp.max(jnp.abs(out - ref)))
    # bf16 MXU inputs + approx reciprocal -> looser tolerance than pure f32.
    assert err1 < 3e-2, f"single-tile max_err={err1}"

    # Case 2: multiple query tiles -> exercises the row-tiled 2-D grid path
    # with K/V DMA'd once per batch (not per q tile).
    S2 = 16
    kx2, kp2 = jax.random.split(kp)
    src2 = jax.random.normal(kx2, (S2, B, D), dtype=jnp.float32)
    params2 = init_params(kp2, D, H, FF)
    out2 = jax.block_until_ready(
        transformer_encoder_layer(src2, params2, H, q_tile=8))
    ref2 = reference(src2, params2, H)
    err2 = float(jnp.max(jnp.abs(out2 - ref2)))
    assert err2 < 3e-2, f"tiled max_err={err2}"

    print("KERNEL_OK")
</pallas_src>

<mosaic_0001>
module attributes {stable_mosaic.version = 11 : i64} {
  func.func @_encoder_layer_kernel(%arg0: i32, %arg1: i32, %arg2: memref<1x8x32xf32, #tpu.memory_space<vmem>>, %arg3: memref<1x4x8x8xbf16, #tpu.memory_space<vmem>>, %arg4: memref<1x4x8x8xbf16, #tpu.memory_space<vmem>>, %arg5: memref<1x4x8x8xbf16, #tpu.memory_space<vmem>>, %arg6: memref<4x8x32xbf16, #tpu.memory_space<vmem>>, %arg7: memref<1x32xf32, #tpu.memory_space<vmem>>, %arg8: memref<1x32xf32, #tpu.memory_space<vmem>>, %arg9: memref<1x32xf32, #tpu.memory_space<vmem>>, %arg10: memref<32x64xbf16, #tpu.memory_space<vmem>>, %arg11: memref<1x64xf32, #tpu.memory_space<vmem>>, %arg12: memref<64x32xbf16, #tpu.memory_space<vmem>>, %arg13: memref<1x32xf32, #tpu.memory_space<vmem>>, %arg14: memref<1x32xf32, #tpu.memory_space<vmem>>, %arg15: memref<1x32xf32, #tpu.memory_space<vmem>>, %arg16: memref<1x8x32xf32, #tpu.memory_space<vmem>>) attributes {dimension_semantics = [#tpu.dimension_semantics<parallel>, #tpu.dimension_semantics<parallel>], iteration_bounds = array<i64: 2, 1>, scalar_prefetch = 0 : i64, scratch_operands = 0 : i64, tpu.core_type = #tpu.core_type<tc>, window_params = [{transform_indices = @transform_0, window_bounds = array<i64: 1, 8, 32>}, {transform_indices = @transform_1, window_bounds = array<i64: 1, 4, 8, 8>}, {transform_indices = @transform_2, window_bounds = array<i64: 1, 4, 8, 8>}, {transform_indices = @transform_3, window_bounds = array<i64: 1, 4, 8, 8>}, {pipeline_mode = #tpu.pipeline_mode<synchronous>, transform_indices = @transform_4, window_bounds = array<i64: 4, 8, 32>}, {pipeline_mode = #tpu.pipeline_mode<synchronous>, transform_indices = @transform_5, window_bounds = array<i64: 1, 32>}, {pipeline_mode = #tpu.pipeline_mode<synchronous>, transform_indices = @transform_6, window_bounds = array<i64: 1, 32>}, {pipeline_mode = #tpu.pipeline_mode<synchronous>, transform_indices = @transform_7, window_bounds = array<i64: 1, 32>}, {pipeline_mode = #tpu.pipeline_mode<synchronous>, transform_indices = @transform_8, window_bounds = array<i64: 32, 64>}, {pipeline_mode = #tpu.pipeline_mode<synchronous>, transform_indices = @transform_9, window_bounds = array<i64: 1, 64>}, {pipeline_mode = #tpu.pipeline_mode<synchronous>, transform_indices = @transform_10, window_bounds = array<i64: 64, 32>}, {pipeline_mode = #tpu.pipeline_mode<synchronous>, transform_indices = @transform_11, window_bounds = array<i64: 1, 32>}, {pipeline_mode = #tpu.pipeline_mode<synchronous>, transform_indices = @transform_12, window_bounds = array<i64: 1, 32>}, {pipeline_mode = #tpu.pipeline_mode<synchronous>, transform_indices = @transform_13, window_bounds = array<i64: 1, 32>}, {transform_indices = @transform_14, window_bounds = array<i64: 1, 8, 32>}]} {
    %c0 = arith.constant 0 : index
    %c0_0 = arith.constant 0 : index
    %c0_1 = arith.constant 0 : index
    %0 = vector.load %arg2[%c0, %c0_0, %c0_1] : memref<1x8x32xf32, #tpu.memory_space<vmem>>, vector<1x8x32xf32>
    %1 = vector.shape_cast %0 : vector<1x8x32xf32> to vector<8x32xf32>
    %c0_2 = arith.constant 0 : index
    %c0_3 = arith.constant 0 : index
    %c0_4 = arith.constant 0 : index
    %c0_5 = arith.constant 0 : index
    %2 = vector.load %arg3[%c0_2, %c0_3, %c0_4, %c0_5] : memref<1x4x8x8xbf16, #tpu.memory_space<vmem>>, vector<1x4x8x8xbf16>
    %3 = vector.shape_cast %2 : vector<1x4x8x8xbf16> to vector<4x8x8xbf16>
    %c0_6 = arith.constant 0 : index
    %c0_7 = arith.constant 0 : index
    %c0_8 = arith.constant 0 : index
    %c0_9 = arith.constant 0 : index
    %4 = vector.load %arg4[%c0_6, %c0_7, %c0_8, %c0_9] : memref<1x4x8x8xbf16, #tpu.memory_space<vmem>>, vector<1x4x8x8xbf16>
    %5 = vector.shape_cast %4 : vector<1x4x8x8xbf16> to vector<4x8x8xbf16>
    %c0_10 = arith.constant 0 : index
    %c0_11 = arith.constant 0 : index
    %c0_12 = arith.constant 0 : index
    %c0_13 = arith.constant 0 : index
    %6 = vector.load %arg5[%c0_10, %c0_11, %c0_12, %c0_13] : memref<1x4x8x8xbf16, #tpu.memory_space<vmem>>, vector<1x4x8x8xbf16>
    %7 = vector.shape_cast %6 : vector<1x4x8x8xbf16> to vector<4x8x8xbf16>
    "tpu.trace_start"() <{level = 10 : i32, message = "hqd,hkd->hqk"}> : () -> ()
    %cst = arith.constant dense<0.000000e+00> : vector<4x8x8xf32>
    %8 = tpu.matmul %3, %5, %cst {dimension_numbers = #tpu.dot_dimension_numbers<[2], [2], [1], [1], [0, 0, 0, 1, 1, 1], [0], [0]>} : vector<4x8x8xbf16>, vector<4x8x8xbf16>, vector<4x8x8xf32> -> vector<4x8x8xf32>
    "tpu.trace_stop"() : () -> ()
    %cst_14 = arith.constant dense<0xFF800000> : vector<4x8xf32>
    %9 = vector.multi_reduction <maximumf>, %8, %cst_14 [2] : vector<4x8x8xf32> to vector<4x8xf32>
    %10 = vector.shape_cast %9 : vector<4x8xf32> to vector<4x8x1xf32>
    %11 = vector.broadcast %10 : vector<4x8x1xf32> to vector<4x8x8xf32>
    %12 = arith.subf %8, %11 : vector<4x8x8xf32>
    %13 = math.exp %12 : vector<4x8x8xf32>
    %cst_15 = arith.constant dense<0.000000e+00> : vector<4x8xf32>
    %14 = vector.multi_reduction <add>, %13, %cst_15 [2] : vector<4x8x8xf32> to vector<4x8xf32>
    %15 = vector.shape_cast %14 : vector<4x8xf32> to vector<4x8x1xf32>
    %16 = tpu.reciprocal %15 {approx = true} : vector<4x8x1xf32> -> vector<4x8x1xf32>
    %17 = vector.broadcast %16 : vector<4x8x1xf32> to vector<4x8x8xf32>
    %18 = arith.mulf %13, %17 : vector<4x8x8xf32>
    %19 = arith.truncf %18 : vector<4x8x8xf32> to vector<4x8x8xbf16>
    "tpu.trace_start"() <{level = 10 : i32, message = "hqk,hkd->hqd"}> : () -> ()
    %cst_16 = arith.constant dense<0.000000e+00> : vector<4x8x8xf32>
    %20 = tpu.matmul %19, %7, %cst_16 {dimension_numbers = #tpu.dot_dimension_numbers<[2], [1], [1], [2], [0, 0, 0, 1, 1, 2], [0], [0]>} : vector<4x8x8xbf16>, vector<4x8x8xbf16>, vector<4x8x8xf32> -> vector<4x8x8xf32>
    "tpu.trace_stop"() : () -> ()
    %21 = arith.truncf %20 : vector<4x8x8xf32> to vector<4x8x8xbf16>
    %cst_17 = arith.constant 0.000000e+00 : f32
    %22 = vector.broadcast %cst_17 : f32 to vector<8x32xf32>
    %23 = vector.extract_strided_slice %21 {offsets = [0, 0, 0], sizes = [1, 8, 8], strides = [1, 1, 1]} : vector<4x8x8xbf16> to vector<1x8x8xbf16>
    %24 = vector.shape_cast %23 : vector<1x8x8xbf16> to vector<8x8xbf16>
    %c0_18 = arith.constant 0 : index
    %c0_19 = arith.constant 0 : index
    %c0_20 = arith.constant 0 : index
    %25 = vector.load %arg6[%c0_18, %c0_19, %c0_20] : memref<4x8x32xbf16, #tpu.memory_space<vmem>>, vector<1x8x32xbf16>
    %26 = vector.shape_cast %25 : vector<1x8x32xbf16> to vector<8x32xbf16>
    %cst_21 = arith.constant dense<0.000000e+00> : vector<8x32xf32>
    %27 = tpu.matmul %24, %26, %cst_21 {dimension_numbers = #tpu.dot_dimension_numbers<[1], [0], [0], [1], [0, 0, 1, 1], [], []>} : vector<8x8xbf16>, vector<8x32xbf16>, vector<8x32xf32> -> vector<8x32xf32>
    %28 = arith.addf %22, %27 : vector<8x32xf32>
    %29 = vector.extract_strided_slice %21 {offsets = [1, 0, 0], sizes = [1, 8, 8], strides = [1, 1, 1]} : vector<4x8x8xbf16> to vector<1x8x8xbf16>
    %30 = vector.shape_cast %29 : vector<1x8x8xbf16> to vector<8x8xbf16>
    %c1 = arith.constant 1 : index
    %c0_22 = arith.constant 0 : index
    %c0_23 = arith.constant 0 : index
    %31 = vector.load %arg6[%c1, %c0_22, %c0_23] : memref<4x8x32xbf16, #tpu.memory_space<vmem>>, vector<1x8x32xbf16>
    %32 = vector.shape_cast %31 : vector<1x8x32xbf16> to vector<8x32xbf16>
    %cst_24 = arith.constant dense<0.000000e+00> : vector<8x32xf32>
    %33 = tpu.matmul %30, %32, %cst_24 {dimension_numbers = #tpu.dot_dimension_numbers<[1], [0], [0], [1], [0, 0, 1, 1], [], []>} : vector<8x8xbf16>, vector<8x32xbf16>, vector<8x32xf32> -> vector<8x32xf32>
    %34 = arith.addf %28, %33 : vector<8x32xf32>
    %35 = vector.extract_strided_slice %21 {offsets = [2, 0, 0], sizes = [1, 8, 8], strides = [1, 1, 1]} : vector<4x8x8xbf16> to vector<1x8x8xbf16>
    %36 = vector.shape_cast %35 : vector<1x8x8xbf16> to vector<8x8xbf16>
    %c2 = arith.constant 2 : index
    %c0_25 = arith.constant 0 : index
    %c0_26 = arith.constant 0 : index
    %37 = vector.load %arg6[%c2, %c0_25, %c0_26] : memref<4x8x32xbf16, #tpu.memory_space<vmem>>, vector<1x8x32xbf16>
    %38 = vector.shape_cast %37 : vector<1x8x32xbf16> to vector<8x32xbf16>
    %cst_27 = arith.constant dense<0.000000e+00> : vector<8x32xf32>
    %39 = tpu.matmul %36, %38, %cst_27 {dimension_numbers = #tpu.dot_dimension_numbers<[1], [0], [0], [1], [0, 0, 1, 1], [], []>} : vector<8x8xbf16>, vector<8x32xbf16>, vector<8x32xf32> -> vector<8x32xf32>
    %40 = arith.addf %34, %39 : vector<8x32xf32>
    %41 = vector.extract_strided_slice %21 {offsets = [3, 0, 0], sizes = [1, 8, 8], strides = [1, 1, 1]} : vector<4x8x8xbf16> to vector<1x8x8xbf16>
    %42 = vector.shape_cast %41 : vector<1x8x8xbf16> to vector<8x8xbf16>
    %c3 = arith.constant 3 : index
    %c0_28 = arith.constant 0 : index
    %c0_29 = arith.constant 0 : index
    %43 = vector.load %arg6[%c3, %c0_28, %c0_29] : memref<4x8x32xbf16, #tpu.memory_space<vmem>>, vector<1x8x32xbf16>
    %44 = vector.shape_cast %43 : vector<1x8x32xbf16> to vector<8x32xbf16>
    %cst_30 = arith.constant dense<0.000000e+00> : vector<8x32xf32>
    %45 = tpu.matmul %42, %44, %cst_30 {dimension_numbers = #tpu.dot_dimension_numbers<[1], [0], [0], [1], [0, 0, 1, 1], [], []>} : vector<8x8xbf16>, vector<8x32xbf16>, vector<8x32xf32> -> vector<8x32xf32>
    %46 = arith.addf %40, %45 : vector<8x32xf32>
    %c0_31 = arith.constant 0 : index
    %c0_32 = arith.constant 0 : index
    %47 = vector.load %arg7[%c0_31, %c0_32] : memref<1x32xf32, #tpu.memory_space<vmem>>, vector<1x32xf32>
    %48 = vector.broadcast %47 : vector<1x32xf32> to vector<8x32xf32>
    %49 = arith.addf %46, %48 : vector<8x32xf32>
    %50 = arith.addf %1, %49 : vector<8x32xf32>
    %c0_33 = arith.constant 0 : index
    %c0_34 = arith.constant 0 : index
    %51 = vector.load %arg8[%c0_33, %c0_34] : memref<1x32xf32, #tpu.memory_space<vmem>>, vector<1x32xf32>
    %c0_35 = arith.constant 0 : index
    %c0_36 = arith.constant 0 : index
    %52 = vector.load %arg9[%c0_35, %c0_36] : memref<1x32xf32, #tpu.memory_space<vmem>>, vector<1x32xf32>
    %cst_37 = arith.constant dense<0.000000e+00> : vector<8xf32>
    %53 = vector.multi_reduction <add>, %50, %cst_37 [1] : vector<8x32xf32> to vector<8xf32>
    %54 = vector.shape_cast %53 : vector<8xf32> to vector<8x1xf32>
    %cst_38 = arith.constant 3.200000e+01 : f32
    %55 = vector.broadcast %cst_38 : f32 to vector<8x1xf32>
    %56 = arith.divf %54, %55 : vector<8x1xf32>
    %57 = vector.broadcast %56 : vector<8x1xf32> to vector<8x32xf32>
    %58 = arith.subf %50, %57 : vector<8x32xf32>
    %59 = arith.mulf %58, %58 : vector<8x32xf32>
    %cst_39 = arith.constant dense<0.000000e+00> : vector<8xf32>
    %60 = vector.multi_reduction <add>, %59, %cst_39 [1] : vector<8x32xf32> to vector<8xf32>
    %61 = vector.shape_cast %60 : vector<8xf32> to vector<8x1xf32>
    %cst_40 = arith.constant 3.200000e+01 : f32
    %62 = vector.broadcast %cst_40 : f32 to vector<8x1xf32>
    %63 = arith.divf %61, %62 : vector<8x1xf32>
    %cst_41 = arith.constant 9.99999974E-6 : f32
    %64 = vector.broadcast %cst_41 : f32 to vector<8x1xf32>
    %65 = arith.addf %63, %64 : vector<8x1xf32>
    %66 = math.rsqrt %65 : vector<8x1xf32>
    %67 = vector.broadcast %66 : vector<8x1xf32> to vector<8x32xf32>
    %68 = arith.mulf %58, %67 : vector<8x32xf32>
    %69 = vector.broadcast %51 : vector<1x32xf32> to vector<8x32xf32>
    %70 = arith.mulf %68, %69 : vector<8x32xf32>
    %71 = vector.broadcast %52 : vector<1x32xf32> to vector<8x32xf32>
    %72 = arith.addf %70, %71 : vector<8x32xf32>
    %73 = arith.truncf %72 : vector<8x32xf32> to vector<8x32xbf16>
    %c0_42 = arith.constant 0 : index
    %c0_43 = arith.constant 0 : index
    %74 = vector.load %arg10[%c0_42, %c0_43] : memref<32x64xbf16, #tpu.memory_space<vmem>>, vector<32x64xbf16>
    %cst_44 = arith.constant dense<0.000000e+00> : vector<8x64xf32>
    %75 = tpu.matmul %73, %74, %cst_44 {dimension_numbers = #tpu.dot_dimension_numbers<[1], [0], [0], [1], [0, 0, 1, 1], [], []>} : vector<8x32xbf16>, vector<32x64xbf16>, vector<8x64xf32> -> vector<8x64xf32>
    %c0_45 = arith.constant 0 : index
    %c0_46 = arith.constant 0 : index
    %76 = vector.load %arg11[%c0_45, %c0_46] : memref<1x64xf32, #tpu.memory_space<vmem>>, vector<1x64xf32>
    %77 = vector.broadcast %76 : vector<1x64xf32> to vector<8x64xf32>
    %78 = arith.addf %75, %77 : vector<8x64xf32>
    %cst_47 = arith.constant 0.000000e+00 : f32
    %79 = vector.broadcast %cst_47 : f32 to vector<8x64xf32>
    %80 = arith.maximumf %78, %79 : vector<8x64xf32>
    %81 = arith.truncf %80 : vector<8x64xf32> to vector<8x64xbf16>
    %c0_48 = arith.constant 0 : index
    %c0_49 = arith.constant 0 : index
    %82 = vector.load %arg12[%c0_48, %c0_49] : memref<64x32xbf16, #tpu.memory_space<vmem>>, vector<64x32xbf16>
    %cst_50 = arith.constant dense<0.000000e+00> : vector<8x32xf32>
    %83 = tpu.matmul %81, %82, %cst_50 {dimension_numbers = #tpu.dot_dimension_numbers<[1], [0], [0], [1], [0, 0, 1, 1], [], []>} : vector<8x64xbf16>, vector<64x32xbf16>, vector<8x32xf32> -> vector<8x32xf32>
    %c0_51 = arith.constant 0 : index
    %c0_52 = arith.constant 0 : index
    %84 = vector.load %arg13[%c0_51, %c0_52] : memref<1x32xf32, #tpu.memory_space<vmem>>, vector<1x32xf32>
    %85 = vector.broadcast %84 : vector<1x32xf32> to vector<8x32xf32>
    %86 = arith.addf %83, %85 : vector<8x32xf32>
    %87 = arith.addf %72, %86 : vector<8x32xf32>
    %c0_53 = arith.constant 0 : index
    %c0_54 = arith.constant 0 : index
    %88 = vector.load %arg14[%c0_53, %c0_54] : memref<1x32xf32, #tpu.memory_space<vmem>>, vector<1x32xf32>
    %c0_55 = arith.constant 0 : index
    %c0_56 = arith.constant 0 : index
    %89 = vector.load %arg15[%c0_55, %c0_56] : memref<1x32xf32, #tpu.memory_space<vmem>>, vector<1x32xf32>
    %cst_57 = arith.constant dense<0.000000e+00> : vector<8xf32>
    %90 = vector.multi_reduction <add>, %87, %cst_57 [1] : vector<8x32xf32> to vector<8xf32>
    %91 = vector.shape_cast %90 : vector<8xf32> to vector<8x1xf32>
    %cst_58 = arith.constant 3.200000e+01 : f32
    %92 = vector.broadcast %cst_58 : f32 to vector<8x1xf32>
    %93 = arith.divf %91, %92 : vector<8x1xf32>
    %94 = vector.broadcast %93 : vector<8x1xf32> to vector<8x32xf32>
    %95 = arith.subf %87, %94 : vector<8x32xf32>
    %96 = arith.mulf %95, %95 : vector<8x32xf32>
    %cst_59 = arith.constant dense<0.000000e+00> : vector<8xf32>
    %97 = vector.multi_reduction <add>, %96, %cst_59 [1] : vector<8x32xf32> to vector<8xf32>
    %98 = vector.shape_cast %97 : vector<8xf32> to vector<8x1xf32>
    %cst_60 = arith.constant 3.200000e+01 : f32
    %99 = vector.broadcast %cst_60 : f32 to vector<8x1xf32>
    %100 = arith.divf %98, %99 : vector<8x1xf32>
    %cst_61 = arith.constant 9.99999974E-6 : f32
    %101 = vector.broadcast %cst_61 : f32 to vector<8x1xf32>
    %102 = arith.addf %100, %101 : vector<8x1xf32>
    %103 = math.rsqrt %102 : vector<8x1xf32>
    %104 = vector.broadcast %103 : vector<8x1xf32> to vector<8x32xf32>
    %105 = arith.mulf %95, %104 : vector<8x32xf32>
    %106 = vector.broadcast %88 : vector<1x32xf32> to vector<8x32xf32>
    %107 = arith.mulf %105, %106 : vector<8x32xf32>
    %108 = vector.broadcast %89 : vector<1x32xf32> to vector<8x32xf32>
    %109 = arith.addf %107, %108 : vector<8x32xf32>
    %c0_62 = arith.constant 0 : index
    %c0_63 = arith.constant 0 : index
    %c0_64 = arith.constant 0 : index
    %110 = vector.load %arg16[%c0_62, %c0_63, %c0_64] : memref<1x8x32xf32, #tpu.memory_space<vmem>>, vector<1x8x32xf32>
    %111 = vector.shape_cast %110 : vector<1x8x32xf32> to vector<8x32xf32>
    %112 = vector.shape_cast %109 : vector<8x32xf32> to vector<1x8x32xf32>
    tpu.vector_store %arg16[%c0_62, %c0_63, %c0_64], %112 {strides = array<i32>} : memref<1x8x32xf32, #tpu.memory_space<vmem>>, vector<1x8x32xf32>,
    return
  }
  func.func @transform_0(%arg0: i32, %arg1: i32) -> (i32, i32, i32) {
    %c0_i32 = arith.constant 0 : i32
    %c0_i32_0 = arith.constant 0 : i32
    return %arg0, %arg1, %c0_i32 : i32, i32, i32
  }
  func.func @transform_1(%arg0: i32, %arg1: i32) -> (i32, i32, i32, i32) {
    %c0_i32 = arith.constant 0 : i32
    %c0_i32_0 = arith.constant 0 : i32
    %c0_i32_1 = arith.constant 0 : i32
    return %arg0, %c0_i32, %arg1, %c0_i32_0 : i32, i32, i32, i32
  }
  func.func @transform_2(%arg0: i32, %arg1: i32) -> (i32, i32, i32, i32) {
    %c0_i32 = arith.constant 0 : i32
    %c0_i32_0 = arith.constant 0 : i32
    %c0_i32_1 = arith.constant 0 : i32
    %c0_i32_2 = arith.constant 0 : i32
    return %arg0, %c0_i32, %c0_i32_0, %c0_i32_1 : i32, i32, i32, i32
  }
  func.func @transform_3(%arg0: i32, %arg1: i32) -> (i32, i32, i32, i32) {
    %c0_i32 = arith.constant 0 : i32
    %c0_i32_0 = arith.constant 0 : i32
    %c0_i32_1 = arith.constant 0 : i32
    %c0_i32_2 = arith.constant 0 : i32
    return %arg0, %c0_i32, %c0_i32_0, %c0_i32_1 : i32, i32, i32, i32
  }
  func.func @transform_4(%arg0: i32, %arg1: i32) -> (i32, i32, i32) {
    %c0_i32 = arith.constant 0 : i32
    %c0_i32_0 = arith.constant 0 : i32
    %c0_i32_1 = arith.constant 0 : i32
    %c0_i32_2 = arith.constant 0 : i32
    return %c0_i32, %c0_i32_0, %c0_i32_1 : i32, i32, i32
  }
  func.func @transform_5(%arg0: i32, %arg1: i32) -> (i32, i32) {
    %c0_i32 = arith.constant 0 : i32
    %c0_i32_0 = arith.constant 0 : i32
    %c0_i32_1 = arith.constant 0 : i32
    return %c0_i32, %c0_i32_0 : i32, i32
  }
  func.func @transform_6(%arg0: i32, %arg1: i32) -> (i32, i32) {
    %c0_i32 = arith.constant 0 : i32
    %c0_i32_0 = arith.constant 0 : i32
    %c0_i32_1 = arith.constant 0 : i32
    return %c0_i32, %c0_i32_0 : i32, i32
  }
  func.func @transform_7(%arg0: i32, %arg1: i32) -> (i32, i32) {
    %c0_i32 = arith.constant 0 : i32
    %c0_i32_0 = arith.constant 0 : i32
    %c0_i32_1 = arith.constant 0 : i32
    return %c0_i32, %c0_i32_0 : i32, i32
  }
  func.func @transform_8(%arg0: i32, %arg1: i32) -> (i32, i32) {
    %c0_i32 = arith.constant 0 : i32
    %c0_i32_0 = arith.constant 0 : i32
    %c0_i32_1 = arith.constant 0 : i32
    return %c0_i32, %c0_i32_0 : i32, i32
  }
  func.func @transform_9(%arg0: i32, %arg1: i32) -> (i32, i32) {
    %c0_i32 = arith.constant 0 : i32
    %c0_i32_0 = arith.constant 0 : i32
    %c0_i32_1 = arith.constant 0 : i32
    return %c0_i32, %c0_i32_0 : i32, i32
  }
  func.func @transform_10(%arg0: i32, %arg1: i32) -> (i32, i32) {
    %c0_i32 = arith.constant 0 : i32
    %c0_i32_0 = arith.constant 0 : i32
    %c0_i32_1 = arith.constant 0 : i32
    return %c0_i32, %c0_i32_0 : i32, i32
  }
  func.func @transform_11(%arg0: i32, %arg1: i32) -> (i32, i32) {
    %c0_i32 = arith.constant 0 : i32
    %c0_i32_0 = arith.constant 0 : i32
    %c0_i32_1 = arith.constant 0 : i32
    return %c0_i32, %c0_i32_0 : i32, i32
  }
  func.func @transform_12(%arg0: i32, %arg1: i32) -> (i32, i32) {
    %c0_i32 = arith.constant 0 : i32
    %c0_i32_0 = arith.constant 0 : i32
    %c0_i32_1 = arith.constant 0 : i32
    return %c0_i32, %c0_i32_0 : i32, i32
  }
  func.func @transform_13(%arg0: i32, %arg1: i32) -> (i32, i32) {
    %c0_i32 = arith.constant 0 : i32
    %c0_i32_0 = arith.constant 0 : i32
    %c0_i32_1 = arith.constant 0 : i32
    return %c0_i32, %c0_i32_0 : i32, i32
  }
  func.func @transform_14(%arg0: i32, %arg1: i32) -> (i32, i32, i32) {
    %c0_i32 = arith.constant 0 : i32
    %c0_i32_0 = arith.constant 0 : i32
    return %arg0, %arg1, %c0_i32 : i32, i32, i32
  }
}

</mosaic_0001>

<llo_original>
// kernel: tpu_custom_call.1
$region0: #{tpu_custom_call.1}
  #allocation0 [shape = 'u32[]', space=smem, size = 0x4, offset = 0x4, fixed_abs, tag = 'smem constant byte address 0x4 - core index']
  #allocation1 [shape = 'u32[144,128]{1,0:T(1,128)}', space=vmem, size = 0x12000, scoped, tag = 'internal scratch']
  %s0 = inlined_call_operand.vmem [shape: f32[2,8,32], index: 0, kind: input, shape index: {}]
  %s1 = inlined_call_operand.vmem [shape: bf16[2,4,8,8], index: 1, kind: input, shape index: {}]
  %s2 = inlined_call_operand.hbm [shape: bf16[2,4,8,8], index: 2, kind: input, shape index: {}]
  %s3 = inlined_call_operand.hbm [shape: bf16[2,4,8,8], index: 3, kind: input, shape index: {}]
  %s4 = inlined_call_operand.hbm [shape: bf16[4,8,32], index: 4, kind: input, shape index: {}]
  %s5 = inlined_call_operand.vmem [shape: f32[1,32], index: 5, kind: input, shape index: {}]
  %s6 = inlined_call_operand.vmem [shape: f32[1,32], index: 6, kind: input, shape index: {}]
  %s7 = inlined_call_operand.vmem [shape: f32[1,32], index: 7, kind: input, shape index: {}]
  %s8 = inlined_call_operand.hbm [shape: bf16[32,64], index: 8, kind: input, shape index: {}]
  %s9 = inlined_call_operand.vmem [shape: f32[1,64], index: 9, kind: input, shape index: {}]
  %s10 = inlined_call_operand.vmem [shape: bf16[64,32], index: 10, kind: input, shape index: {}]
  %s11 = inlined_call_operand.vmem [shape: f32[1,32], index: 11, kind: input, shape index: {}]
  %s12 = inlined_call_operand.vmem [shape: f32[1,32], index: 12, kind: input, shape index: {}]
  %s13 = inlined_call_operand.vmem [shape: f32[1,32], index: 13, kind: input, shape index: {}]
  %s14 = inlined_call_operand.hbm [shape: f32[2,8,32], index: 14, kind: output, shape index: {}]
  %s15 = sld [smem:[#allocation0]]
  $region105: #{tpu_custom_call.1} parent=0
    _
  %s17 = ssub.s32 1, %s15
  %s18 = scalar_select 0, %s17, %s15
  $region1: #{tpu_custom_call.1} parent=0
    #allocation2 [shape = 'u8[16384]{0}', space=vmem, size = 0x4000, scoped, tag = 'input window, operand 2']
    #allocation3 [shape = 's32[2]{0}', space=sflag, size = 0x8, scoped, tag = 'scoped memory for tpu_custom_call.1']
    #allocation4 [shape = 's32[2]{0}', space=sflag, size = 0x8, scoped, tag = 'scoped memory for tpu_custom_call.1']
    #allocation5 [shape = 'u8[16384]{0}', space=vmem, size = 0x4000, scoped, tag = 'input window, operand 3']
    #allocation6 [shape = 's32[2]{0}', space=sflag, size = 0x8, scoped, tag = 'scoped memory for tpu_custom_call.1']
    #allocation7 [shape = 'u8[8192]{0}', space=vmem, size = 0x2000, scoped, tag = 'input window, operand 4, single buffered']
    #allocation8 [shape = 'u8[8192]{0}', space=vmem, size = 0x2000, scoped, tag = 'input window, operand 8, single buffered']
    #allocation9 [shape = 's32[1]{0}', space=sflag, size = 0x4, scoped, tag = 'scoped memory for tpu_custom_call.1']
    #allocation10 [shape = 'u8[8192]{0}', space=vmem, size = 0x2000, scoped, tag = 'output window, operand 0']
    %19 = vsyncpa [#allocation3], 0
    %s20 = scalar_lea.sflag [#allocation3], 1
    %21 = vsyncpa %s20, 0
    %22 = vsyncpa [#allocation6], 0
    %s23 = scalar_lea.sflag [#allocation6], 1
    %24 = vsyncpa %s23, 0
    %25 = vsyncpa [#allocation9], 0
    %26 = vsyncpa [#allocation4], 0
    %s27 = scalar_lea.sflag [#allocation4], 1
    %28 = vsyncpa %s27, 0
    loop: start=0, step=1, limit=4
    $region2: #{tpu_custom_call.1} parent=1 // loop_pre_header
      _
    $region3: #{tpu_custom_call.1} parent=1 // loop_header
      %s30 = sphi 0, %s34
      %p31 = scmp.ge.s32.totalorder %s30, 4
      %s37 = sphi 0, %s49
      %s38 = sphi 0, %s45
      %s39 = sphi 0, %s37
      %s40 = sphi 0, %s38
      %s41 = sphi 0, %s39
      %s42 = sphi 0, %s40
      %s54 = sphi 0, %s56
      %s57 = sphi 0, %s54
      %s58 = sphi 0, %s57
      %s74 = sphi 0, %s58
      %s82 = sphi 0, %s84
      %s85 = sphi 0, %s82
      %s86 = sphi 0, %s85
      %s102 = sphi 0, %s86
      %s108 = sphi 0, %s110
      %s111 = sphi 0, %s108
      %s112 = sphi 0, %s111
      %s128 = sphi 0, %s112
      %s134 = sphi 0, %s136
      %s137 = sphi 0, %s134
      %s138 = sphi 0, %s137
      %s154 = sphi 0, %s138
      %s158 = sphi 0, %s158
      %s160 = sphi 0, %s158
      %s161 = sphi 0, %s160
      %s175 = sphi 0, %s161
      %s179 = sphi 0, %s179
      %s181 = sphi 0, %s179
      %s182 = sphi 0, %s181
      %s196 = sphi 0, %s182
      %s200 = sphi 0, %s200
      %s202 = sphi 0, %s200
      %s203 = sphi 0, %s202
      %s217 = sphi 0, %s203
      %s221 = sphi 0, %s221
      %s223 = sphi 0, %s221
      %s224 = sphi 0, %s223
      %s238 = sphi 0, %s224
      %s242 = sphi 0, %s242
      %s244 = sphi 0, %s242
      %s245 = sphi 0, %s244
      %s259 = sphi 0, %s245
      %s263 = sphi 0, %s263
      %s265 = sphi 0, %s263
      %s266 = sphi 0, %s265
      %s280 = sphi 0, %s266
      %s284 = sphi 0, %s284
      %s286 = sphi 0, %s284
      %s287 = sphi 0, %s286
      %s301 = sphi 0, %s287
      %s305 = sphi 0, %s305
      %s307 = sphi 0, %s305
      %s308 = sphi 0, %s307
      %s322 = sphi 0, %s308
      %s326 = sphi 0, %s326
      %s328 = sphi 0, %s326
      %s329 = sphi 0, %s328
      %s343 = sphi 0, %s329
      %s347 = sphi 0, %s347
      %s349 = sphi 0, %s347
      %s350 = sphi 0, %s349
      %s364 = sphi 0, %s350
      %s372 = sphi 0, %s374
      %s375 = sphi 0, %s372
      %s376 = sphi 0, %s375
      %s392 = sphi 0, %s376
    $region4: #{tpu_custom_call.1} parent=1 // loop_header_branch
      %33 = sbr.rel (%p31) target = $region8
    $region5: #{tpu_custom_call.1} parent=1 // loop_body
      %s35 = ssub.s32 %s30, 1
      %s36 = ssub.s32 %s30, 2
      %s43 = sadd.s32 1, %s38
      %p44 = scmp.ge.s32.totalorder %s43, 1
      %s45 = scalar_select %p44, 0, %s43
      %s46 = sadd.s32 1, %s37
      %s47 = scalar_select %p44, %s46, %s37
      %p48 = scmp.ge.s32.totalorder %s47, 2
      %s49 = scalar_select %p48, 0, %s47
      %s50 = ssub.s32 %s37, %s49
      %s51 = ssub.s32 %s38, %s45
      %s52 = sor.u32 %s50, %s51
      %p53 = scmp.eq.s32.totalorder %s52, 0
      %s55 = sadd.s32 %s54, 1
      %s56 = scalar_select %p53, %s54, %s55
      %p59 = pneg %p53
      %p60 = scmp.eq.s32.totalorder %s30, 1
      %p61 = por %p59, %p60
      %p62 = scmp.ne.s32.totalorder %s54, %s57
      %p63 = scmp.eq.s32.totalorder %s30, 0
      %p64 = por %p62, %p63
      %p65 = scmp.ne.s32.totalorder %s54, %s57
      %p66 = scmp.eq.s32.totalorder %s35, 1
      %p67 = por %p65, %p66
      %p68 = scmp.ne.s32.totalorder %s57, %s58
      %p69 = scmp.eq.s32.totalorder %s35, 0
      %p70 = por %p68, %p69
      %p71 = scmp.ne.s32.totalorder %s57, %s58
      %p72 = scmp.eq.s32.totalorder %s36, 1
      %p73 = por %p71, %p72
      %p75 = scmp.ne.s32.totalorder %s58, %s74
      %p76 = scmp.eq.s32.totalorder %s36, 0
      %p77 = por %p75, %p76
      %s78 = ssub.s32 %s37, %s49
      %s79 = ssub.s32 %s38, %s45
      %s80 = sor.u32 %s78, %s79
      %p81 = scmp.eq.s32.totalorder %s80, 0
      %s83 = sadd.s32 %s82, 1
      %s84 = scalar_select %p81, %s82, %s83
      %p87 = pneg %p81
      %p88 = scmp.eq.s32.totalorder %s30, 1
      %p89 = por %p87, %p88
      %p90 = scmp.ne.s32.totalorder %s82, %s85
      %p91 = scmp.eq.s32.totalorder %s30, 0
      %p92 = por %p90, %p91
      %p93 = scmp.ne.s32.totalorder %s82, %s85
      %p94 = scmp.eq.s32.totalorder %s35, 1
      %p95 = por %p93, %p94
      %p96 = scmp.ne.s32.totalorder %s85, %s86
      %p97 = scmp.eq.s32.totalorder %s35, 0
      %p98 = por %p96, %p97
      %p99 = scmp.ne.s32.totalorder %s85, %s86
      %p100 = scmp.eq.s32.totalorder %s36, 1
      %p101 = por %p99, %p100
      %p103 = scmp.ne.s32.totalorder %s86, %s102
      %p104 = scmp.eq.s32.totalorder %s36, 0
      %p105 = por %p103, %p104
      %s106 = ssub.s32 %s37, %s49
      %p107 = scmp.eq.s32.totalorder %s106, 0
      %s109 = sadd.s32 %s108, 1
      %s110 = scalar_select %p107, %s108, %s109
      %p113 = pneg %p107
      %p114 = scmp.eq.s32.totalorder %s30, 1
      %p115 = por %p113, %p114
      %p116 = scmp.ne.s32.totalorder %s108, %s111
      %p117 = scmp.eq.s32.totalorder %s30, 0
      %p118 = por %p116, %p117
      %p119 = scmp.ne.s32.totalorder %s108, %s111
      %p120 = scmp.eq.s32.totalorder %s35, 1
      %p121 = por %p119, %p120
      %p122 = scmp.ne.s32.totalorder %s111, %s112
      %p123 = scmp.eq.s32.totalorder %s35, 0
      %p124 = por %p122, %p123
      %p125 = scmp.ne.s32.totalorder %s111, %s112
      %p126 = scmp.eq.s32.totalorder %s36, 1
      %p127 = por %p125, %p126
      %p129 = scmp.ne.s32.totalorder %s112, %s128
      %p130 = scmp.eq.s32.totalorder %s36, 0
      %p131 = por %p129, %p130
      %s132 = ssub.s32 %s37, %s49
      %p133 = scmp.eq.s32.totalorder %s132, 0
      %s135 = sadd.s32 %s134, 1
      %s136 = scalar_select %p133, %s134, %s135
      %p139 = pneg %p133
      %p140 = scmp.eq.s32.totalorder %s30, 1
      %p141 = por %p139, %p140
      %p142 = scmp.ne.s32.totalorder %s134, %s137
      %p143 = scmp.eq.s32.totalorder %s30, 0
      %p144 = por %p142, %p143
      %p145 = scmp.ne.s32.totalorder %s134, %s137
      %p146 = scmp.eq.s32.totalorder %s35, 1
      %p147 = por %p145, %p146
      %p148 = scmp.ne.s32.totalorder %s137, %s138
      %p149 = scmp.eq.s32.totalorder %s35, 0
      %p150 = por %p148, %p149
      %p151 = scmp.ne.s32.totalorder %s137, %s138
      %p152 = scmp.eq.s32.totalorder %s36, 1
      %p153 = por %p151, %p152
      %p155 = scmp.ne.s32.totalorder %s138, %s154
      %p156 = scmp.eq.s32.totalorder %s36, 0
      %p157 = por %p155, %p156
      %s159 = sadd.s32 %s158, 1
      %p162 = scmp.eq.s32.totalorder %s30, 1
      %p163 = scmp.ne.s32.totalorder %s158, %s160
      %p164 = scmp.eq.s32.totalorder %s30, 0
      %p165 = por %p163, %p164
      %p166 = scmp.ne.s32.totalorder %s158, %s160
      %p167 = scmp.eq.s32.totalorder %s35, 1
      %p168 = por %p166, %p167
      %p169 = scmp.ne.s32.totalorder %s160, %s161
      %p170 = scmp.eq.s32.totalorder %s35, 0
      %p171 = por %p169, %p170
      %p172 = scmp.ne.s32.totalorder %s160, %s161
      %p173 = scmp.eq.s32.totalorder %s36, 1
      %p174 = por %p172, %p173
      %p176 = scmp.ne.s32.totalorder %s161, %s175
      %p177 = scmp.eq.s32.totalorder %s36, 0
      %p178 = por %p176, %p177
      %s180 = sadd.s32 %s179, 1
      %p183 = scmp.eq.s32.totalorder %s30, 1
      %p184 = scmp.ne.s32.totalorder %s179, %s181
      %p185 = scmp.eq.s32.totalorder %s30, 0
      %p186 = por %p184, %p185
      %p187 = scmp.ne.s32.totalorder %s179, %s181
      %p188 = scmp.eq.s32.totalorder %s35, 1
      %p189 = por %p187, %p188
      %p190 = scmp.ne.s32.totalorder %s181, %s182
      %p191 = scmp.eq.s32.totalorder %s35, 0
      %p192 = por %p190, %p191
      %p193 = scmp.ne.s32.totalorder %s181, %s182
      %p194 = scmp.eq.s32.totalorder %s36, 1
      %p195 = por %p193, %p194
      %p197 = scmp.ne.s32.totalorder %s182, %s196
      %p198 = scmp.eq.s32.totalorder %s36, 0
      %p199 = por %p197, %p198
      %s201 = sadd.s32 %s200, 1
      %p204 = scmp.eq.s32.totalorder %s30, 1
      %p205 = scmp.ne.s32.totalorder %s200, %s202
      %p206 = scmp.eq.s32.totalorder %s30, 0
      %p207 = por %p205, %p206
      %p208 = scmp.ne.s32.totalorder %s200, %s202
      %p209 = scmp.eq.s32.totalorder %s35, 1
      %p210 = por %p208, %p209
      %p211 = scmp.ne.s32.totalorder %s202, %s203
      %p212 = scmp.eq.s32.totalorder %s35, 0
      %p213 = por %p211, %p212
      %p214 = scmp.ne.s32.totalorder %s202, %s203
      %p215 = scmp.eq.s32.totalorder %s36, 1
      %p216 = por %p214, %p215
      %p218 = scmp.ne.s32.totalorder %s203, %s217
      %p219 = scmp.eq.s32.totalorder %s36, 0
      %p220 = por %p218, %p219
      %s222 = sadd.s32 %s221, 1
      %p225 = scmp.eq.s32.totalorder %s30, 1
      %p226 = scmp.ne.s32.totalorder %s221, %s223
      %p227 = scmp.eq.s32.totalorder %s30, 0
      %p228 = por %p226, %p227
      %p229 = scmp.ne.s32.totalorder %s221, %s223
      %p230 = scmp.eq.s32.totalorder %s35, 1
      %p231 = por %p229, %p230
      %p232 = scmp.ne.s32.totalorder %s223, %s224
      %p233 = scmp.eq.s32.totalorder %s35, 0
      %p234 = por %p232, %p233
      %p235 = scmp.ne.s32.totalorder %s223, %s224
      %p236 = scmp.eq.s32.totalorder %s36, 1
      %p237 = por %p235, %p236
      %p239 = scmp.ne.s32.totalorder %s224, %s238
      %p240 = scmp.eq.s32.totalorder %s36, 0
      %p241 = por %p239, %p240
      %s243 = sadd.s32 %s242, 1
      %p246 = scmp.eq.s32.totalorder %s30, 1
      %p247 = scmp.ne.s32.totalorder %s242, %s244
      %p248 = scmp.eq.s32.totalorder %s30, 0
      %p249 = por %p247, %p248
      %p250 = scmp.ne.s32.totalorder %s242, %s244
      %p251 = scmp.eq.s32.totalorder %s35, 1
      %p252 = por %p250, %p251
      %p253 = scmp.ne.s32.totalorder %s244, %s245
      %p254 = scmp.eq.s32.totalorder %s35, 0
      %p255 = por %p253, %p254
      %p256 = scmp.ne.s32.totalorder %s244, %s245
      %p257 = scmp.eq.s32.totalorder %s36, 1
      %p258 = por %p256, %p257
      %p260 = scmp.ne.s32.totalorder %s245, %s259
      %p261 = scmp.eq.s32.totalorder %s36, 0
      %p262 = por %p260, %p261
      %s264 = sadd.s32 %s263, 1
      %p267 = scmp.eq.s32.totalorder %s30, 1
      %p268 = scmp.ne.s32.totalorder %s263, %s265
      %p269 = scmp.eq.s32.totalorder %s30, 0
      %p270 = por %p268, %p269
      %p271 = scmp.ne.s32.totalorder %s263, %s265
      %p272 = scmp.eq.s32.totalorder %s35, 1
      %p273 = por %p271, %p272
      %p274 = scmp.ne.s32.totalorder %s265, %s266
      %p275 = scmp.eq.s32.totalorder %s35, 0
      %p276 = por %p274, %p275
      %p277 = scmp.ne.s32.totalorder %s265, %s266
      %p278 = scmp.eq.s32.totalorder %s36, 1
      %p279 = por %p277, %p278
      %p281 = scmp.ne.s32.totalorder %s266, %s280
      %p282 = scmp.eq.s32.totalorder %s36, 0
      %p283 = por %p281, %p282
      %s285 = sadd.s32 %s284, 1
      %p288 = scmp.eq.s32.totalorder %s30, 1
      %p289 = scmp.ne.s32.totalorder %s284, %s286
      %p290 = scmp.eq.s32.totalorder %s30, 0
      %p291 = por %p289, %p290
      %p292 = scmp.ne.s32.totalorder %s284, %s286
      %p293 = scmp.eq.s32.totalorder %s35, 1
      %p294 = por %p292, %p293
      %p295 = scmp.ne.s32.totalorder %s286, %s287
      %p296 = scmp.eq.s32.totalorder %s35, 0
      %p297 = por %p295, %p296
      %p298 = scmp.ne.s32.totalorder %s286, %s287
      %p299 = scmp.eq.s32.totalorder %s36, 1
      %p300 = por %p298, %p299
      %p302 = scmp.ne.s32.totalorder %s287, %s301
      %p303 = scmp.eq.s32.totalorder %s36, 0
      %p304 = por %p302, %p303
      %s306 = sadd.s32 %s305, 1
      %p309 = scmp.eq.s32.totalorder %s30, 1
      %p310 = scmp.ne.s32.totalorder %s305, %s307
      %p311 = scmp.eq.s32.totalorder %s30, 0
      %p312 = por %p310, %p311
      %p313 = scmp.ne.s32.totalorder %s305, %s307
      %p314 = scmp.eq.s32.totalorder %s35, 1
      %p315 = por %p313, %p314
      %p316 = scmp.ne.s32.totalorder %s307, %s308
      %p317 = scmp.eq.s32.totalorder %s35, 0
      %p318 = por %p316, %p317
      %p319 = scmp.ne.s32.totalorder %s307, %s308
      %p320 = scmp.eq.s32.totalorder %s36, 1
      %p321 = por %p319, %p320
      %p323 = scmp.ne.s32.totalorder %s308, %s322
      %p324 = scmp.eq.s32.totalorder %s36, 0
      %p325 = por %p323, %p324
      %s327 = sadd.s32 %s326, 1
      %p330 = scmp.eq.s32.totalorder %s30, 1
      %p331 = scmp.ne.s32.totalorder %s326, %s328
      %p332 = scmp.eq.s32.totalorder %s30, 0
      %p333 = por %p331, %p332
      %p334 = scmp.ne.s32.totalorder %s326, %s328
      %p335 = scmp.eq.s32.totalorder %s35, 1
      %p336 = por %p334, %p335
      %p337 = scmp.ne.s32.totalorder %s328, %s329
      %p338 = scmp.eq.s32.totalorder %s35, 0
      %p339 = por %p337, %p338
      %p340 = scmp.ne.s32.totalorder %s328, %s329
      %p341 = scmp.eq.s32.totalorder %s36, 1
      %p342 = por %p340, %p341
      %p344 = scmp.ne.s32.totalorder %s329, %s343
      %p345 = scmp.eq.s32.totalorder %s36, 0
      %p346 = por %p344, %p345
      %s348 = sadd.s32 %s347, 1
      %p351 = scmp.eq.s32.totalorder %s30, 1
      %p352 = scmp.ne.s32.totalorder %s347, %s349
      %p353 = scmp.eq.s32.totalorder %s30, 0
      %p354 = por %p352, %p353
      %p355 = scmp.ne.s32.totalorder %s347, %s349
      %p356 = scmp.eq.s32.totalorder %s35, 1
      %p357 = por %p355, %p356
      %p358 = scmp.ne.s32.totalorder %s349, %s350
      %p359 = scmp.eq.s32.totalorder %s35, 0
      %p360 = por %p358, %p359
      %p361 = scmp.ne.s32.totalorder %s349, %s350
      %p362 = scmp.eq.s32.totalorder %s36, 1
      %p363 = por %p361, %p362
      %p365 = scmp.ne.s32.totalorder %s350, %s364
      %p366 = scmp.eq.s32.totalorder %s36, 0
      %p367 = por %p365, %p366
      %s368 = ssub.s32 %s37, %s49
      %s369 = ssub.s32 %s38, %s45
      %s370 = sor.u32 %s368, %s369
      %p371 = scmp.eq.s32.totalorder %s370, 0
      %s373 = sadd.s32 %s372, 1
      %s374 = scalar_select %p371, %s372, %s373
      %p377 = pneg %p371
      %p378 = scmp.eq.s32.totalorder %s30, 1
      %p379 = por %p377, %p378
      %p380 = scmp.ne.s32.totalorder %s372, %s375
      %p381 = scmp.eq.s32.totalorder %s30, 0
      %p382 = por %p380, %p381
      %p383 = scmp.ne.s32.totalorder %s372, %s375
      %p384 = scmp.eq.s32.totalorder %s35, 1
      %p385 = por %p383, %p384
      %p386 = scmp.ne.s32.totalorder %s375, %s376
      %p387 = scmp.eq.s32.totalorder %s35, 0
      %p388 = por %p386, %p387
      %p389 = scmp.ne.s32.totalorder %s375, %s376
      %p390 = scmp.eq.s32.totalorder %s36, 1
      %p391 = por %p389, %p390
      %p393 = scmp.ne.s32.totalorder %s376, %s392
      %p394 = scmp.eq.s32.totalorder %s36, 0
      %p395 = por %p393, %p394
      %p396 = scmp.le.s32.totalorder 1, %s30
      %p397 = scmp.lt.s32.totalorder %s30, 3
      %p398 = pnand %p396, %p397
      %p399 = pneg %p398
      // Predicated region
      $region9: #{tpu_custom_call.1} parent=5 // pred_check
        _
      $region10: #{tpu_custom_call.1} parent=5 // pred_check_branch
        %401 = sbr.rel (%p398) target = $region12
      $region11: #{tpu_custom_call.1} parent=5 // pred_region
        %s402 = ssub.s32 %s30, 1
        // Predicated region
        $region13: #{tpu_custom_call.1} parent=11 // pred_check
          %p403 = pneg %p171
        $region14: #{tpu_custom_call.1} parent=11 // pred_check_branch
          %405 = sbr.rel (%p403) target = $region16
        $region15: #{tpu_custom_call.1} parent=11 // pred_region
          %s407 = ssub.s32 256, 256
          %408 = vsyncadd [#allocation6], %s407
          %s409 = sshll.u32 [#allocation7], 4
          %s410 = int_to_ptr.vmem [resolvable:$true] %s409
          %415 = dma.hbm_to_vmem [thread:$0]  %s4, 256, %s410, [#allocation6], 64, 64, 4
        $region16: #{tpu_custom_call.1} parent=11 // pred_fallthru
          _
        // Predicated region
        $region17: #{tpu_custom_call.1} parent=11 // pred_check
          %p416 = pneg %p192
        $region18: #{tpu_custom_call.1} parent=11 // pred_check_branch
          %418 = sbr.rel (%p416) target = $region20
        $region19: #{tpu_custom_call.1} parent=11 // pred_region
          _
        $region20: #{tpu_custom_call.1} parent=11 // pred_fallthru
          _
        // Predicated region
        $region21: #{tpu_custom_call.1} parent=11 // pred_check
          %p419 = pneg %p213
        $region22: #{tpu_custom_call.1} parent=11 // pred_check_branch
          %421 = sbr.rel (%p419) target = $region24
        $region23: #{tpu_custom_call.1} parent=11 // pred_region
          _
        $region24: #{tpu_custom_call.1} parent=11 // pred_fallthru
          _
        // Predicated region
        $region25: #{tpu_custom_call.1} parent=11 // pred_check
          %p422 = pneg %p234
        $region26: #{tpu_custom_call.1} parent=11 // pred_check_branch
          %424 = sbr.rel (%p422) target = $region28
        $region27: #{tpu_custom_call.1} parent=11 // pred_region
          _
        $region28: #{tpu_custom_call.1} parent=11 // pred_fallthru
          _
        // Predicated region
        $region29: #{tpu_custom_call.1} parent=11 // pred_check
          %p425 = pneg %p255
        $region30: #{tpu_custom_call.1} parent=11 // pred_check_branch
          %427 = sbr.rel (%p425) target = $region32
        $region31: #{tpu_custom_call.1} parent=11 // pred_region
          %s429 = ssub.s32 256, 256
          %430 = vsyncadd [#allocation9], %s429
          %s431 = sshll.u32 [#allocation8], 4
          %s432 = int_to_ptr.vmem [resolvable:$true] %s431
          %437 = dma.hbm_to_vmem [thread:$0]  %s8, 256, %s432, [#allocation9], 64, 64, 4
        $region32: #{tpu_custom_call.1} parent=11 // pred_fallthru
          _
        // Predicated region
        $region33: #{tpu_custom_call.1} parent=11 // pred_check
          %p438 = pneg %p276
        $region34: #{tpu_custom_call.1} parent=11 // pred_check_branch
          %440 = sbr.rel (%p438) target = $region36
        $region35: #{tpu_custom_call.1} parent=11 // pred_region
          _
        $region36: #{tpu_custom_call.1} parent=11 // pred_fallthru
          _
        // Predicated region
        $region37: #{tpu_custom_call.1} parent=11 // pred_check
          %p441 = pneg %p297
        $region38: #{tpu_custom_call.1} parent=11 // pred_check_branch
          %443 = sbr.rel (%p441) target = $region40
        $region39: #{tpu_custom_call.1} parent=11 // pred_region
          _
        $region40: #{tpu_custom_call.1} parent=11 // pred_fallthru
          _
        // Predicated region
        $region41: #{tpu_custom_call.1} parent=11 // pred_check
          %p444 = pneg %p318
        $region42: #{tpu_custom_call.1} parent=11 // pred_check_branch
          %446 = sbr.rel (%p444) target = $region44
        $region43: #{tpu_custom_call.1} parent=11 // pred_region
          _
        $region44: #{tpu_custom_call.1} parent=11 // pred_fallthru
          _
        // Predicated region
        $region45: #{tpu_custom_call.1} parent=11 // pred_check
          %p447 = pneg %p339
        $region46: #{tpu_custom_call.1} parent=11 // pred_check_branch
          %449 = sbr.rel (%p447) target = $region48
        $region47: #{tpu_custom_call.1} parent=11 // pred_region
          _
        $region48: #{tpu_custom_call.1} parent=11 // pred_fallthru
          _
        // Predicated region
        $region49: #{tpu_custom_call.1} parent=11 // pred_check
          %p450 = pneg %p360
        $region50: #{tpu_custom_call.1} parent=11 // pred_check_branch
          %452 = sbr.rel (%p450) target = $region52
        $region51: #{tpu_custom_call.1} parent=11 // pred_region
          _
        $region52: #{tpu_custom_call.1} parent=11 // pred_fallthru
          _
      $region12: #{tpu_custom_call.1} parent=5 // pred_fallthru
        _
      %p453 = scmp.lt.s32.totalorder %s30, 2
      // Predicated region
      $region53: #{tpu_custom_call.1} parent=5 // pred_check
        %p454 = pneg %p453
      $region54: #{tpu_custom_call.1} parent=5 // pred_check_branch
        %456 = sbr.rel (%p454) target = $region56
      $region55: #{tpu_custom_call.1} parent=5 // pred_region
        // Predicated region
        $region57: #{tpu_custom_call.1} parent=55 // pred_check
          %p457 = pneg %p64
        $region58: #{tpu_custom_call.1} parent=55 // pred_check_branch
          %459 = sbr.rel (%p457) target = $region60
        $region59: #{tpu_custom_call.1} parent=55 // pred_region
          %p460 = scmp.lt.s32.totalorder %s37, 1
          %s461 = scalar_select %p460, %s37, 1
          %p462 = scmp.lt.s32.totalorder %s38, 0
          %s463 = scalar_select %p462, %s38, 0
          %s464 = sadd.s32 %s463, %s461
          %s465 = smul.addr %s464, 8
          %s466 = scalar_lea.vmem %s0, %s465
        $region60: #{tpu_custom_call.1} parent=55 // pred_fallthru
          _
        // Predicated region
        $region61: #{tpu_custom_call.1} parent=55 // pred_check
          %p467 = pneg %p92
        $region62: #{tpu_custom_call.1} parent=55 // pred_check_branch
          %469 = sbr.rel (%p467) target = $region64
        $region63: #{tpu_custom_call.1} parent=55 // pred_region
          %p470 = scmp.lt.s32.totalorder %s37, 1
          %s471 = scalar_select %p470, %s37, 1
          %p472 = scmp.lt.s32.totalorder %s38, 0
          %s473 = scalar_select %p472, %s38, 0
          %s474 = smul.addr %s471, 4
          %s475 = sadd.s32 %s473, %s474
          %s476 = smul.addr %s475, 4
          %s477 = scalar_lea.vmem %s1, %s476
        $region64: #{tpu_custom_call.1} parent=55 // pred_fallthru
          _
        // Predicated region
        $region65: #{tpu_custom_call.1} parent=55 // pred_check
          %p478 = pneg %p118
        $region66: #{tpu_custom_call.1} parent=55 // pred_check_branch
          %480 = sbr.rel (%p478) target = $region68
        $region67: #{tpu_custom_call.1} parent=55 // pred_region
          %s481 = sand.u32 %s108, 1
          %s482 = scalar_lea.sflag [#allocation3], %s481
          %s483 = sand.u32 %s108, 1
          %s484 = smul.addr %s483, 16
          %s485 = scalar_lea.vmem [#allocation2], %s484
          %s487 = ssub.s32 256, 256
          %488 = vsyncadd %s482, %s487
          %s489 = smul.addr %s37, 4
          %s490 = smul.addr %s489, 64
          %s491 = scalar_lea.hbm %s2, %s490
          %s492 = sshll.u32 %s485, 4
          %s493 = int_to_ptr.vmem [resolvable:$true] %s492
          %498 = dma.hbm_to_vmem [thread:$0]  %s491, 256, %s493, %s482, 64, 64, 4
        $region68: #{tpu_custom_call.1} parent=55 // pred_fallthru
          _
        // Predicated region
        $region69: #{tpu_custom_call.1} parent=55 // pred_check
          %p499 = pneg %p144
        $region70: #{tpu_custom_call.1} parent=55 // pred_check_branch
          %501 = sbr.rel (%p499) target = $region72
        $region71: #{tpu_custom_call.1} parent=55 // pred_region
          %s502 = sand.u32 %s30, 1
          %s503 = scalar_lea.sflag [#allocation6], %s502
          %s504 = sand.u32 %s134, 1
          %s505 = smul.addr %s504, 16
          %s506 = scalar_lea.vmem [#allocation5], %s505
          %s508 = ssub.s32 256, 256
          %509 = vsyncadd %s503, %s508
          %s510 = smul.addr %s37, 4
          %s511 = smul.addr %s510, 64
          %s512 = scalar_lea.hbm %s3, %s511
          %s513 = sshll.u32 %s506, 4
          %s514 = int_to_ptr.vmem [resolvable:$true] %s513
          %519 = dma.hbm_to_vmem [thread:$0]  %s512, 256, %s514, %s503, 64, 64, 4
        $region72: #{tpu_custom_call.1} parent=55 // pred_fallthru
          _
      $region56: #{tpu_custom_call.1} parent=5 // pred_fallthru
        _
      %p520 = scmp.le.s32.totalorder 1, %s30
      %p521 = scmp.lt.s32.totalorder %s30, 3
      %p522 = pnand %p520, %p521
      %p523 = pneg %p522
      // Predicated region
      $region73: #{tpu_custom_call.1} parent=5 // pred_check
        _
      $region74: #{tpu_custom_call.1} parent=5 // pred_check_branch
        %525 = sbr.rel (%p522) target = $region76
      $region75: #{tpu_custom_call.1} parent=5 // pred_region
        %s526 = ssub.s32 %s30, 1
        %s527 = sand.u32 %s111, 1
        %s528 = scalar_lea.sflag [#allocation3], %s527
        %s529 = sand.u32 %s111, 1
        %s530 = smul.addr %s529, 16
        %s531 = scalar_lea.vmem [#allocation2], %s530
        // Predicated region
        $region77: #{tpu_custom_call.1} parent=75 // pred_check
          %p532 = pneg %p124
        $region78: #{tpu_custom_call.1} parent=75 // pred_check_branch
          %534 = sbr.rel (%p532) target = $region80
        $region79: #{tpu_custom_call.1} parent=75 // pred_region
          %535 = dma.done %s528, 256
        $region80: #{tpu_custom_call.1} parent=75 // pred_fallthru
          _
        %s536 = sand.u32 %s35, 1
        %s537 = scalar_lea.sflag [#allocation6], %s536
        %s538 = sand.u32 %s137, 1
        %s539 = smul.addr %s538, 16
        %s540 = scalar_lea.vmem [#allocation5], %s539
        // Predicated region
        $region81: #{tpu_custom_call.1} parent=75 // pred_check
          %p541 = pneg %p150
        $region82: #{tpu_custom_call.1} parent=75 // pred_check_branch
          %543 = sbr.rel (%p541) target = $region84
        $region83: #{tpu_custom_call.1} parent=75 // pred_region
          %544 = dma.done %s537, 256
        $region84: #{tpu_custom_call.1} parent=75 // pred_fallthru
          _
        // Predicated region
        $region85: #{tpu_custom_call.1} parent=75 // pred_check
          %p545 = pneg %p171
        $region86: #{tpu_custom_call.1} parent=75 // pred_check_branch
          %547 = sbr.rel (%p545) target = $region88
        $region87: #{tpu_custom_call.1} parent=75 // pred_region
          %548 = dma.done [#allocation6], 256
        $region88: #{tpu_custom_call.1} parent=75 // pred_fallthru
          _
        // Predicated region
        $region89: #{tpu_custom_call.1} parent=75 // pred_check
          %p549 = pneg %p255
        $region90: #{tpu_custom_call.1} parent=75 // pred_check_branch
          %551 = sbr.rel (%p549) target = $region92
        $region91: #{tpu_custom_call.1} parent=75 // pred_region
          %552 = dma.done [#allocation9], 256
        $region92: #{tpu_custom_call.1} parent=75 // pred_fallthru
          _
        %p553 = scmp.lt.s32.totalorder %s39, 1
        %s554 = scalar_select %p553, %s39, 1
        %p555 = scmp.lt.s32.totalorder %s40, 0
        %s556 = scalar_select %p555, %s40, 0
        %s557 = sadd.s32 %s556, %s554
        %s558 = smul.addr %s557, 8
        %s559 = scalar_lea.vmem %s0, %s558
        %p560 = pneg %p70
        %p561 = pneg %p67
        %p562 = scmp.lt.s32.totalorder %s39, 1
        %s563 = scalar_select %p562, %s39, 1
        %p564 = scmp.lt.s32.totalorder %s40, 0
        %s565 = scalar_select %p564, %s40, 0
        %s566 = smul.addr %s563, 4
        %s567 = sadd.s32 %s565, %s566
        %s568 = smul.addr %s567, 4
        %s569 = scalar_lea.vmem %s1, %s568
        %p570 = pneg %p98
        %p571 = pneg %p95
        %s572 = sand.u32 %s111, 1
        %s573 = scalar_lea.sflag [#allocation3], %s572
        %s574 = sand.u32 %s111, 1
        %s575 = smul.addr %s574, 16
        %s576 = scalar_lea.vmem [#allocation2], %s575
        %p577 = pneg %p124
        %p578 = pneg %p121
        %s579 = sand.u32 %s35, 1
        %s580 = scalar_lea.sflag [#allocation6], %s579
        %s581 = sand.u32 %s137, 1
        %s582 = smul.addr %s581, 16
        %s583 = scalar_lea.vmem [#allocation5], %s582
        %p584 = pneg %p150
        %p585 = pneg %p147
        %p586 = pneg %p171
        %p587 = pneg %p168
        %p588 = pneg %p192
        %p589 = pneg %p189
        %p590 = pneg %p213
        %p591 = pneg %p210
        %p592 = pneg %p234
        %p593 = pneg %p231
        %p594 = pneg %p255
        %p595 = pneg %p252
        %p596 = pneg %p276
        %p597 = pneg %p273
        %p598 = pneg %p297
        %p599 = pneg %p294
        %p600 = pneg %p318
        %p601 = pneg %p315
        %p602 = pneg %p339
        %p603 = pneg %p336
        %p604 = pneg %p360
        %p605 = pneg %p357
        %p606 = pneg %p388
        %p607 = pneg %p385
        %s608 = sand.u32 %s375, 1
        %s609 = scalar_lea.sflag [#allocation4], %s608
        %s610 = sand.u32 %s375, 1
        %s611 = smul.addr %s610, 8
        %s612 = scalar_lea.vmem [#allocation10], %s611
        %p613 = scmp.lt.s32.totalorder %s39, 1
        %s614 = scalar_select %p613, %s39, 1
        %p615 = scmp.lt.s32.totalorder %s40, 0
        %s616 = scalar_select %p615, %s40, 0
        %s617 = sadd.s32 %s616, %s614
        %s618 = smul.addr %s617, 8
        %s619 = scalar_lea.vmem %s0, %s618
        %p620 = scmp.lt.s32.totalorder %s39, 1
        %s621 = scalar_select %p620, %s39, 1
        %p622 = scmp.lt.s32.totalorder %s40, 0
        %s623 = scalar_select %p622, %s40, 0
        %s624 = smul.addr %s621, 4
        %s625 = sadd.s32 %s623, %s624
        %s626 = smul.addr %s625, 4
        %s627 = scalar_lea.vmem %s1, %s626
        %v629 = vld [vmem:[%s619] sm:$0xff]
        %v630 = vld [vmem:[%s627] sm:$0xf]
        %v631 = vld [vmem:[%s627 + $0x4] sm:$0xf]
        %v632 = vld [vmem:[%s627 + $0x8] sm:$0xf]
        %v633 = vld [vmem:[%s627 + $0xc] sm:$0xf]
        %v634 = vld [vmem:[%s531] sm:$0xf]
        %v635 = vld [vmem:[%s531 + $0x4] sm:$0xf]
        %v636 = vld [vmem:[%s531 + $0x8] sm:$0xf]
        %v637 = vld [vmem:[%s531 + $0xc] sm:$0xf]
        %v638 = vld [vmem:[%s540] sm:$0xf]
        %v639 = vld [vmem:[%s540 + $0x4] sm:$0xf]
        %v640 = vld [vmem:[%s540 + $0x8] sm:$0xf]
        %v641 = vld [vmem:[%s540 + $0xc] sm:$0xf]
        %vm642 = vcmask 64512
        %v644 = vsel %vm642, %v630, 0
        %v647 = vsel %vm642, %v634, 0
        %649 = vmatprep.subr.bf16.mxu0 0
        %650 = vmatpush1.bf16.xpose.msra.mxu0 %v647
        %651 = vmatprep.subr.bf16.mxu0 0
        %652 = vmatpush1.bf16.xpose.msra.mxu0 0
        %653 = vmatprep.subr.bf16.mxu0 0
        %654 = vmatpush1.bf16.xpose.msra.mxu0 0
        %655 = vmatprep.subr.bf16.mxu0 0
        %656 = vmatpush1.bf16.xpose.msra.mxu0 0
        %657 = vmatprep.subr.bf16.mxu0 0
        %658 = vmatpush1.bf16.xpose.msra.mxu0 0
        %659 = vmatprep.subr.bf16.mxu0 0
        %660 = vmatpush1.bf16.xpose.msra.mxu0 0
        %661 = vmatprep.subr.bf16.mxu0 0
        %662 = vmatpush1.bf16.xpose.msra.mxu0 0
        %663 = vmatprep.subr.bf16.mxu0 0
        %664 = vmatpush1.bf16.xpose.msra.mxu0 0
        %665 = vmatprep.subr.bf16.mxu0 0
        %666 = vmatpush1.bf16.xpose.msra.mxu0 0
        %667 = vmatprep.subr.bf16.mxu0 0
        %668 = vmatpush1.bf16.xpose.msra.mxu0 0
        %669 = vmatprep.subr.bf16.mxu0 0
        %670 = vmatpush1.bf16.xpose.msra.mxu0 0
        %671 = vmatprep.subr.bf16.mxu0 0
        %672 = vmatpush1.bf16.xpose.msra.mxu0 0
        %673 = vmatprep.subr.bf16.mxu0 0
        %674 = vmatpush1.bf16.xpose.msra.mxu0 0
        %675 = vmatprep.subr.bf16.mxu0 0
        %676 = vmatpush1.bf16.xpose.msra.mxu0 0
        %677 = vmatprep.subr.bf16.mxu0 0
        %678 = vmatpush1.bf16.xpose.msra.mxu0 0
        %679 = vmatprep.subr.bf16.mxu0 0
        %680 = vmatpush1.bf16.xpose.msra.mxu0 0
        %681 = vmatprep.mubr.bf16.mxu0 0
        %682 = vmatmul.mubr.bf16.gmra.mrb[0].mxu0 %v644
        %v683 = vpop.f32.mrb[0].mxu0
        %v684 = vadd.f32 0.0, %v683
        %v685 = vpop.f32.mrb[0].mxu0
        %v686 = vpop.f32.mrb[0].mxu0
        %v687 = vpop.f32.mrb[0].mxu0
        %688 = vdwg.mxu0
        %v690 = vsel %vm642, %v631, 0
        %v693 = vsel %vm642, %v635, 0
        %695 = vmatprep.subr.bf16.mxu0 0
        %696 = vmatpush1.bf16.xpose.msra.mxu0 %v693
        %697 = vmatprep.subr.bf16.mxu0 0
        %698 = vmatpush1.bf16.xpose.msra.mxu0 0
        %699 = vmatprep.subr.bf16.mxu0 0
        %700 = vmatpush1.bf16.xpose.msra.mxu0 0
        %701 = vmatprep.subr.bf16.mxu0 0
        %702 = vmatpush1.bf16.xpose.msra.mxu0 0
        %703 = vmatprep.subr.bf16.mxu0 0
        %704 = vmatpush1.bf16.xpose.msra.mxu0 0
        %705 = vmatprep.subr.bf16.mxu0 0
        %706 = vmatpush1.bf16.xpose.msra.mxu0 0
        %707 = vmatprep.subr.bf16.mxu0 0
        %708 = vmatpush1.bf16.xpose.msra.mxu0 0
        %709 = vmatprep.subr.bf16.mxu0 0
        %710 = vmatpush1.bf16.xpose.msra.mxu0 0
        %711 = vmatprep.subr.bf16.mxu0 0
        %712 = vmatpush1.bf16.xpose.msra.mxu0 0
        %713 = vmatprep.subr.bf16.mxu0 0
        %714 = vmatpush1.bf16.xpose.msra.mxu0 0
        %715 = vmatprep.subr.bf16.mxu0 0
        %716 = vmatpush1.bf16.xpose.msra.mxu0 0
        %717 = vmatprep.subr.bf16.mxu0 0
        %718 = vmatpush1.bf16.xpose.msra.mxu0 0
        %719 = vmatprep.subr.bf16.mxu0 0
        %720 = vmatpush1.bf16.xpose.msra.mxu0 0
        %721 = vmatprep.subr.bf16.mxu0 0
        %722 = vmatpush1.bf16.xpose.msra.mxu0 0
        %723 = vmatprep.subr.bf16.mxu0 0
        %724 = vmatpush1.bf16.xpose.msra.mxu0 0
        %725 = vmatprep.subr.bf16.mxu0 0
        %726 = vmatpush1.bf16.xpose.msra.mxu0 0
        %727 = vmatprep.mubr.bf16.mxu0 0
        %728 = vmatmul.mubr.bf16.gmra.mrb[0].mxu0 %v690
        %v729 = vpop.f32.mrb[0].mxu0
        %v730 = vadd.f32 0.0, %v729
        %v731 = vpop.f32.mrb[0].mxu0
        %v732 = vpop.f32.mrb[0].mxu0
        %v733 = vpop.f32.mrb[0].mxu0
        %734 = vdwg.mxu0
        %v736 = vsel %vm642, %v632, 0
        %v739 = vsel %vm642, %v636, 0
        %741 = vmatprep.subr.bf16.mxu0 0
        %742 = vmatpush1.bf16.xpose.msra.mxu0 %v739
        %743 = vmatprep.subr.bf16.mxu0 0
        %744 = vmatpush1.bf16.xpose.msra.mxu0 0
        %745 = vmatprep.subr.bf16.mxu0 0
        %746 = vmatpush1.bf16.xpose.msra.mxu0 0
        %747 = vmatprep.subr.bf16.mxu0 0
        %748 = vmatpush1.bf16.xpose.msra.mxu0 0
        %749 = vmatprep.subr.bf16.mxu0 0
        %750 = vmatpush1.bf16.xpose.msra.mxu0 0
        %751 = vmatprep.subr.bf16.mxu0 0
        %752 = vmatpush1.bf16.xpose.msra.mxu0 0
        %753 = vmatprep.subr.bf16.mxu0 0
        %754 = vmatpush1.bf16.xpose.msra.mxu0 0
        %755 = vmatprep.subr.bf16.mxu0 0
        %756 = vmatpush1.bf16.xpose.msra.mxu0 0
        %757 = vmatprep.subr.bf16.mxu0 0
        %758 = vmatpush1.bf16.xpose.msra.mxu0 0
        %759 = vmatprep.subr.bf16.mxu0 0
        %760 = vmatpush1.bf16.xpose.msra.mxu0 0
        %761 = vmatprep.subr.bf16.mxu0 0
        %762 = vmatpush1.bf16.xpose.msra.mxu0 0
        %763 = vmatprep.subr.bf16.mxu0 0
        %764 = vmatpush1.bf16.xpose.msra.mxu0 0
        %765 = vmatprep.subr.bf16.mxu0 0
        %766 = vmatpush1.bf16.xpose.msra.mxu0 0
        %767 = vmatprep.subr.bf16.mxu0 0
        %768 = vmatpush1.bf16.xpose.msra.mxu0 0
        %769 = vmatprep.subr.bf16.mxu0 0
        %770 = vmatpush1.bf16.xpose.msra.mxu0 0
        %771 = vmatprep.subr.bf16.mxu0 0
        %772 = vmatpush1.bf16.xpose.msra.mxu0 0
        %773 = vmatprep.mubr.bf16.mxu0 0
        %774 = vmatmul.mubr.bf16.gmra.mrb[0].mxu0 %v736
        %v775 = vpop.f32.mrb[0].mxu0
        %v776 = vadd.f32 0.0, %v775
        %v777 = vpop.f32.mrb[0].mxu0
        %v778 = vpop.f32.mrb[0].mxu0
        %v779 = vpop.f32.mrb[0].mxu0
        %780 = vdwg.mxu0
        %v782 = vsel %vm642, %v633, 0
        %v785 = vsel %vm642, %v637, 0
        %787 = vmatprep.subr.bf16.mxu0 0
        %788 = vmatpush1.bf16.xpose.msra.mxu0 %v785
        %789 = vmatprep.subr.bf16.mxu0 0
        %790 = vmatpush1.bf16.xpose.msra.mxu0 0
        %791 = vmatprep.subr.bf16.mxu0 0
        %792 = vmatpush1.bf16.xpose.msra.mxu0 0
        %793 = vmatprep.subr.bf16.mxu0 0
        %794 = vmatpush1.bf16.xpose.msra.mxu0 0
        %795 = vmatprep.subr.bf16.mxu0 0
        %796 = vmatpush1.bf16.xpose.msra.mxu0 0
        %797 = vmatprep.subr.bf16.mxu0 0
        %798 = vmatpush1.bf16.xpose.msra.mxu0 0
        %799 = vmatprep.subr.bf16.mxu0 0
        %800 = vmatpush1.bf16.xpose.msra.mxu0 0
        %801 = vmatprep.subr.bf16.mxu0 0
        %802 = vmatpush1.bf16.xpose.msra.mxu0 0
        %803 = vmatprep.subr.bf16.mxu0 0
        %804 = vmatpush1.bf16.xpose.msra.mxu0 0
        %805 = vmatprep.subr.bf16.mxu0 0
        %806 = vmatpush1.bf16.xpose.msra.mxu0 0
        %807 = vmatprep.subr.bf16.mxu0 0
        %808 = vmatpush1.bf16.xpose.msra.mxu0 0
        %809 = vmatprep.subr.bf16.mxu0 0
        %810 = vmatpush1.bf16.xpose.msra.mxu0 0
        %811 = vmatprep.subr.bf16.mxu0 0
        %812 = vmatpush1.bf16.xpose.msra.mxu0 0
        %813 = vmatprep.subr.bf16.mxu0 0
        %814 = vmatpush1.bf16.xpose.msra.mxu0 0
        %815 = vmatprep.subr.bf16.mxu0 0
        %816 = vmatpush1.bf16.xpose.msra.mxu0 0
        %817 = vmatprep.subr.bf16.mxu0 0
        %818 = vmatpush1.bf16.xpose.msra.mxu0 0
        %819 = vmatprep.mubr.bf16.mxu0 0
        %820 = vmatmul.mubr.bf16.gmra.mrb[0].mxu0 %v782
        %v821 = vpop.f32.mrb[0].mxu0
        %v822 = vadd.f32 0.0, %v821
        %v823 = vpop.f32.mrb[0].mxu0
        %v824 = vpop.f32.mrb[0].mxu0
        %v825 = vpop.f32.mrb[0].mxu0
        %826 = vdwg.mxu0
        %v827 = vsel %vm642, %v684, -inf
        %828 = vmax.xlane.f32.xlu0 %v827
        %v829 = vpop.xlane.xlu0 %828
        %v830 = vsel %vm642, %v730, -inf
        %831 = vmax.xlane.f32.xlu0 %v830
        %v832 = vpop.xlane.xlu0 %831
        %v833 = vsel %vm642, %v776, -inf
        %834 = vmax.xlane.f32.xlu0 %v833
        %v835 = vpop.xlane.xlu0 %834
        %v836 = vsel %vm642, %v822, -inf
        %837 = vmax.xlane.f32.xlu0 %v836
        %v838 = vpop.xlane.xlu0 %837
        %v839 = vsub.f32 %v684, %v829
        %v840 = vsub.f32 %v730, %v832
        %v841 = vsub.f32 %v776, %v835
        %v842 = vsub.f32 %v822, %v838
        %v843 = vmul.f32 %v839, 1.442695
        %v844 = vpow.pop %v843
        %v845 = vmul.f32 %v840, 1.442695
        %v846 = vpow.pop %v845
        %v847 = vmul.f32 %v841, 1.442695
        %v848 = vpow.pop %v847
        %v849 = vmul.f32 %v842, 1.442695
        %v850 = vpow.pop %v849
        %v851 = vsel %vm642, %v844, 0.0
        %852 = vadd.xlane.f32.xlu0 %v851
        %v853 = vpop.xlane.xlu0 %852
        %v854 = vsel %vm642, %v846, 0.0
        %855 = vadd.xlane.f32.xlu0 %v854
        %v856 = vpop.xlane.xlu0 %855
        %v857 = vsel %vm642, %v848, 0.0
        %858 = vadd.xlane.f32.xlu0 %v857
        %v859 = vpop.xlane.xlu0 %858
        %v860 = vsel %vm642, %v850, 0.0
        %861 = vadd.xlane.f32.xlu0 %v860
        %v862 = vpop.xlane.xlu0 %861
        %v863 = vrcp.pop %v853
        %v864 = vrcp.pop %v856
        %v865 = vrcp.pop %v859
        %v866 = vrcp.pop %v862
        %v867 = vmul.f32 %v844, %v863
        %v868 = vmul.f32 %v846, %v864
        %v869 = vmul.f32 %v848, %v865
        %v870 = vmul.f32 %v850, %v866
        %v871 = vpack.c.bf16 %v867, %v867
        %v872 = vpack.c.bf16 %v868, %v868
        %v873 = vpack.c.bf16 %v869, %v869
        %v874 = vpack.c.bf16 %v870, %v870
        %v876 = vsel %vm642, %v871, 0
        %vm878 = vcmask 1043456
        %v880 = vsel %vm878, %v638, 0
        %882 = vmatprep.subr.bf16.mxu0 0
        %883 = vmatpush1.bf16.msra.mxu0 %v880
        %884 = vmatprep.subr.bf16.mxu0 0
        %885 = vmatpush1.bf16.msra.mxu0 0
        %886 = vmatprep.subr.bf16.mxu0 0
        %887 = vmatpush1.bf16.msra.mxu0 0
        %888 = vmatprep.subr.bf16.mxu0 0
        %889 = vmatpush1.bf16.msra.mxu0 0
        %890 = vmatprep.subr.bf16.mxu0 0
        %891 = vmatpush1.bf16.msra.mxu0 0
        %892 = vmatprep.subr.bf16.mxu0 0
        %893 = vmatpush1.bf16.msra.mxu0 0
        %894 = vmatprep.subr.bf16.mxu0 0
        %895 = vmatpush1.bf16.msra.mxu0 0
        %896 = vmatprep.subr.bf16.mxu0 0
        %897 = vmatpush1.bf16.msra.mxu0 0
        %898 = vmatprep.subr.bf16.mxu0 0
        %899 = vmatpush1.bf16.msra.mxu0 0
        %900 = vmatprep.subr.bf16.mxu0 0
        %901 = vmatpush1.bf16.msra.mxu0 0
        %902 = vmatprep.subr.bf16.mxu0 0
        %903 = vmatpush1.bf16.msra.mxu0 0
        %904 = vmatprep.subr.bf16.mxu0 0
        %905 = vmatpush1.bf16.msra.mxu0 0
        %906 = vmatprep.subr.bf16.mxu0 0
        %907 = vmatpush1.bf16.msra.mxu0 0
        %908 = vmatprep.subr.bf16.mxu0 0
        %909 = vmatpush1.bf16.msra.mxu0 0
        %910 = vmatprep.subr.bf16.mxu0 0
        %911 = vmatpush1.bf16.msra.mxu0 0
        %912 = vmatprep.subr.bf16.mxu0 0
        %913 = vmatpush1.bf16.msra.mxu0 0
        %914 = vmatprep.mubr.bf16.mxu0 0
        %915 = vmatmul.mubr.bf16.gmra.mrb[0].mxu0 %v876
        %v916 = vpop.f32.mrb[0].mxu0
        %v917 = vadd.f32 0.0, %v916
        %v918 = vpop.f32.mrb[0].mxu0
        %v919 = vpop.f32.mrb[0].mxu0
        %v920 = vpop.f32.mrb[0].mxu0
        %921 = vdwg.mxu0
        %v923 = vsel %vm642, %v872, 0
        %v926 = vsel %vm878, %v639, 0
        %928 = vmatprep.subr.bf16.mxu0 0
        %929 = vmatpush1.bf16.msra.mxu0 %v926
        %930 = vmatprep.subr.bf16.mxu0 0
        %931 = vmatpush1.bf16.msra.mxu0 0
        %932 = vmatprep.subr.bf16.mxu0 0
        %933 = vmatpush1.bf16.msra.mxu0 0
        %934 = vmatprep.subr.bf16.mxu0 0
        %935 = vmatpush1.bf16.msra.mxu0 0
        %936 = vmatprep.subr.bf16.mxu0 0
        %937 = vmatpush1.bf16.msra.mxu0 0
        %938 = vmatprep.subr.bf16.mxu0 0
        %939 = vmatpush1.bf16.msra.mxu0 0
        %940 = vmatprep.subr.bf16.mxu0 0
        %941 = vmatpush1.bf16.msra.mxu0 0
        %942 = vmatprep.subr.bf16.mxu0 0
        %943 = vmatpush1.bf16.msra.mxu0 0
        %944 = vmatprep.subr.bf16.mxu0 0
        %945 = vmatpush1.bf16.msra.mxu0 0
        %946 = vmatprep.subr.bf16.mxu0 0
        %947 = vmatpush1.bf16.msra.mxu0 0
        %948 = vmatprep.subr.bf16.mxu0 0
        %949 = vmatpush1.bf16.msra.mxu0 0
        %950 = vmatprep.subr.bf16.mxu0 0
        %951 = vmatpush1.bf16.msra.mxu0 0
        %952 = vmatprep.subr.bf16.mxu0 0
        %953 = vmatpush1.bf16.msra.mxu0 0
        %954 = vmatprep.subr.bf16.mxu0 0
        %955 = vmatpush1.bf16.msra.mxu0 0
        %956 = vmatprep.subr.bf16.mxu0 0
        %957 = vmatpush1.bf16.msra.mxu0 0
        %958 = vmatprep.subr.bf16.mxu0 0
        %959 = vmatpush1.bf16.msra.mxu0 0
        %960 = vmatprep.mubr.bf16.mxu0 0
        %961 = vmatmul.mubr.bf16.gmra.mrb[0].mxu0 %v923
        %v962 = vpop.f32.mrb[0].mxu0
        %v963 = vadd.f32 0.0, %v962
        %v964 = vpop.f32.mrb[0].mxu0
        %v965 = vpop.f32.mrb[0].mxu0
        %v966 = vpop.f32.mrb[0].mxu0
        %967 = vdwg.mxu0
        %v969 = vsel %vm642, %v873, 0
        %v972 = vsel %vm878, %v640, 0
        %974 = vmatprep.subr.bf16.mxu0 0
        %975 = vmatpush1.bf16.msra.mxu0 %v972
        %976 = vmatprep.subr.bf16.mxu0 0
        %977 = vmatpush1.bf16.msra.mxu0 0
        %978 = vmatprep.subr.bf16.mxu0 0
        %979 = vmatpush1.bf16.msra.mxu0 0
        %980 = vmatprep.subr.bf16.mxu0 0
        %981 = vmatpush1.bf16.msra.mxu0 0
        %982 = vmatprep.subr.bf16.mxu0 0
        %983 = vmatpush1.bf16.msra.mxu0 0
        %984 = vmatprep.subr.bf16.mxu0 0
        %985 = vmatpush1.bf16.msra.mxu0 0
        %986 = vmatprep.subr.bf16.mxu0 0
        %987 = vmatpush1.bf16.msra.mxu0 0
        %988 = vmatprep.subr.bf16.mxu0 0
        %989 = vmatpush1.bf16.msra.mxu0 0
        %990 = vmatprep.subr.bf16.mxu0 0
        %991 = vmatpush1.bf16.msra.mxu0 0
        %992 = vmatprep.subr.bf16.mxu0 0
        %993 = vmatpush1.bf16.msra.mxu0 0
        %994 = vmatprep.subr.bf16.mxu0 0
        %995 = vmatpush1.bf16.msra.mxu0 0
        %996 = vmatprep.subr.bf16.mxu0 0
        %997 = vmatpush1.bf16.msra.mxu0 0
        %998 = vmatprep.subr.bf16.mxu0 0
        %999 = vmatpush1.bf16.msra.mxu0 0
        %1000 = vmatprep.subr.bf16.mxu0 0
        %1001 = vmatpush1.bf16.msra.mxu0 0
        %1002 = vmatprep.subr.bf16.mxu0 0
        %1003 = vmatpush1.bf16.msra.mxu0 0
        %1004 = vmatprep.subr.bf16.mxu0 0
        %1005 = vmatpush1.bf16.msra.mxu0 0
        %1006 = vmatprep.mubr.bf16.mxu0 0
        %1007 = vmatmul.mubr.bf16.gmra.mrb[0].mxu0 %v969
        %v1008 = vpop.f32.mrb[0].mxu0
        %v1009 = vadd.f32 0.0, %v1008
        %v1010 = vpop.f32.mrb[0].mxu0
        %v1011 = vpop.f32.mrb[0].mxu0
        %v1012 = vpop.f32.mrb[0].mxu0
        %1013 = vdwg.mxu0
        %v1015 = vsel %vm642, %v874, 0
        %v1018 = vsel %vm878, %v641, 0
        %1020 = vmatprep.subr.bf16.mxu0 0
        %1021 = vmatpush1.bf16.msra.mxu0 %v1018
        %1022 = vmatprep.subr.bf16.mxu0 0
        %1023 = vmatpush1.bf16.msra.mxu0 0
        %1024 = vmatprep.subr.bf16.mxu0 0
        %1025 = vmatpush1.bf16.msra.mxu0 0
        %1026 = vmatprep.subr.bf16.mxu0 0
        %1027 = vmatpush1.bf16.msra.mxu0 0
        %1028 = vmatprep.subr.bf16.mxu0 0
        %1029 = vmatpush1.bf16.msra.mxu0 0
        %1030 = vmatprep.subr.bf16.mxu0 0
        %1031 = vmatpush1.bf16.msra.mxu0 0
        %1032 = vmatprep.subr.bf16.mxu0 0
        %1033 = vmatpush1.bf16.msra.mxu0 0
        %1034 = vmatprep.subr.bf16.mxu0 0
        %1035 = vmatpush1.bf16.msra.mxu0 0
        %1036 = vmatprep.subr.bf16.mxu0 0
        %1037 = vmatpush1.bf16.msra.mxu0 0
        %1038 = vmatprep.subr.bf16.mxu0 0
        %1039 = vmatpush1.bf16.msra.mxu0 0
        %1040 = vmatprep.subr.bf16.mxu0 0
        %1041 = vmatpush1.bf16.msra.mxu0 0
        %1042 = vmatprep.subr.bf16.mxu0 0
        %1043 = vmatpush1.bf16.msra.mxu0 0
        %1044 = vmatprep.subr.bf16.mxu0 0
        %1045 = vmatpush1.bf16.msra.mxu0 0
        %1046 = vmatprep.subr.bf16.mxu0 0
        %1047 = vmatpush1.bf16.msra.mxu0 0
        %1048 = vmatprep.subr.bf16.mxu0 0
        %1049 = vmatpush1.bf16.msra.mxu0 0
        %1050 = vmatprep.subr.bf16.mxu0 0
        %1051 = vmatpush1.bf16.msra.mxu0 0
        %1052 = vmatprep.mubr.bf16.mxu0 0
        %1053 = vmatmul.mubr.bf16.gmra.mrb[0].mxu0 %v1015
        %v1054 = vpop.f32.mrb[0].mxu0
        %v1055 = vadd.f32 0.0, %v1054
        %v1056 = vpop.f32.mrb[0].mxu0
        %v1057 = vpop.f32.mrb[0].mxu0
        %v1058 = vpop.f32.mrb[0].mxu0
        %1059 = vdwg.mxu0
        %v1060 = vpack.c.bf16 %v917, %v917
        %v1061 = vpack.c.bf16 %v963, %v963
        %v1062 = vpack.c.bf16 %v1009, %v1009
        %v1063 = vpack.c.bf16 %v1055, %v1055
        %v1064 = vld [vmem:[#allocation7] sm:$0xf]
        %s1065 = scalar_lea.vmem [#allocation7], 4
        %v1066 = vld [vmem:[%s1065] sm:$0xf]
        %v1068 = vsel %vm642, %v1061, 0
        %v1071 = vsel %vm878, %v1066, 0
        %1073 = vmatprep.subr.bf16.mxu0 0
        %1074 = vmatpush1.bf16.msra.mxu0 %v1071
        %1075 = vmatprep.subr.bf16.mxu0 0
        %1076 = vmatpush1.bf16.msra.mxu0 0
        %1077 = vmatprep.subr.bf16.mxu0 0
        %1078 = vmatpush1.bf16.msra.mxu0 0
        %1079 = vmatprep.subr.bf16.mxu0 0
        %1080 = vmatpush1.bf16.msra.mxu0 0
        %1081 = vmatprep.subr.bf16.mxu0 0
        %1082 = vmatpush1.bf16.msra.mxu0 0
        %1083 = vmatprep.subr.bf16.mxu0 0
        %1084 = vmatpush1.bf16.msra.mxu0 0
        %1085 = vmatprep.subr.bf16.mxu0 0
        %1086 = vmatpush1.bf16.msra.mxu0 0
        %1087 = vmatprep.subr.bf16.mxu0 0
        %1088 = vmatpush1.bf16.msra.mxu0 0
        %1089 = vmatprep.subr.bf16.mxu0 0
        %1090 = vmatpush1.bf16.msra.mxu0 0
        %1091 = vmatprep.subr.bf16.mxu0 0
        %1092 = vmatpush1.bf16.msra.mxu0 0
        %1093 = vmatprep.subr.bf16.mxu0 0
        %1094 = vmatpush1.bf16.msra.mxu0 0
        %1095 = vmatprep.subr.bf16.mxu0 0
        %1096 = vmatpush1.bf16.msra.mxu0 0
        %1097 = vmatprep.subr.bf16.mxu0 0
        %1098 = vmatpush1.bf16.msra.mxu0 0
        %1099 = vmatprep.subr.bf16.mxu0 0
        %1100 = vmatpush1.bf16.msra.mxu0 0
        %1101 = vmatprep.subr.bf16.mxu0 0
        %1102 = vmatpush1.bf16.msra.mxu0 0
        %1103 = vmatprep.subr.bf16.mxu0 0
        %1104 = vmatpush1.bf16.msra.mxu0 0
        %1105 = vmatprep.mubr.bf16.mxu0 0
        %1106 = vmatmul.mubr.bf16.gmra.mrb[0].mxu0 %v1068
        %v1107 = vpop.f32.mrb[0].mxu0
        %v1108 = vadd.f32 0.0, %v1107
        %v1109 = vpop.f32.mrb[0].mxu0
        %v1110 = vpop.f32.mrb[0].mxu0
        %v1111 = vpop.f32.mrb[0].mxu0
        %1112 = vdwg.mxu0
        %v1114 = vsel %vm642, %v1060, 0
        %v1117 = vsel %vm878, %v1064, 0
        %1119 = vmatprep.subr.bf16.mxu0 0
        %1120 = vmatpush1.bf16.msra.mxu0 %v1117
        %1121 = vmatprep.subr.bf16.mxu0 0
        %1122 = vmatpush1.bf16.msra.mxu0 0
        %1123 = vmatprep.subr.bf16.mxu0 0
        %1124 = vmatpush1.bf16.msra.mxu0 0
        %1125 = vmatprep.subr.bf16.mxu0 0
        %1126 = vmatpush1.bf16.msra.mxu0 0
        %1127 = vmatprep.subr.bf16.mxu0 0
        %1128 = vmatpush1.bf16.msra.mxu0 0
        %1129 = vmatprep.subr.bf16.mxu0 0
        %1130 = vmatpush1.bf16.msra.mxu0 0
        %1131 = vmatprep.subr.bf16.mxu0 0
        %1132 = vmatpush1.bf16.msra.mxu0 0
        %1133 = vmatprep.subr.bf16.mxu0 0
        %1134 = vmatpush1.bf16.msra.mxu0 0
        %1135 = vmatprep.subr.bf16.mxu0 0
        %1136 = vmatpush1.bf16.msra.mxu0 0
        %1137 = vmatprep.subr.bf16.mxu0 0
        %1138 = vmatpush1.bf16.msra.mxu0 0
        %1139 = vmatprep.subr.bf16.mxu0 0
        %1140 = vmatpush1.bf16.msra.mxu0 0
        %1141 = vmatprep.subr.bf16.mxu0 0
        %1142 = vmatpush1.bf16.msra.mxu0 0
        %1143 = vmatprep.subr.bf16.mxu0 0
        %1144 = vmatpush1.bf16.msra.mxu0 0
        %1145 = vmatprep.subr.bf16.mxu0 0
        %1146 = vmatpush1.bf16.msra.mxu0 0
        %1147 = vmatprep.subr.bf16.mxu0 0
        %1148 = vmatpush1.bf16.msra.mxu0 0
        %1149 = vmatprep.subr.bf16.mxu0 0
        %1150 = vmatpush1.bf16.msra.mxu0 0
        %1151 = vmatprep.mubr.bf16.mxu0 0
        %1152 = vmatmul.mubr.bf16.gmra.mrb[0].mxu0 %v1114
        %v1153 = vpop.f32.mrb[0].mxu0
        %v1154 = vadd.f32 %v1108, %v1153
        %v1155 = vpop.f32.mrb[0].mxu0
        %v1156 = vpop.f32.mrb[0].mxu0
        %v1157 = vpop.f32.mrb[0].mxu0
        %1158 = vdwg.mxu0
        %s1159 = scalar_lea.vmem [#allocation7], 8
        %v1160 = vld [vmem:[%s1159] sm:$0xf]
        %v1162 = vsel %vm642, %v1062, 0
        %v1165 = vsel %vm878, %v1160, 0
        %1167 = vmatprep.subr.bf16.mxu0 0
        %1168 = vmatpush1.bf16.msra.mxu0 %v1165
        %1169 = vmatprep.subr.bf16.mxu0 0
        %1170 = vmatpush1.bf16.msra.mxu0 0
        %1171 = vmatprep.subr.bf16.mxu0 0
        %1172 = vmatpush1.bf16.msra.mxu0 0
        %1173 = vmatprep.subr.bf16.mxu0 0
        %1174 = vmatpush1.bf16.msra.mxu0 0
        %1175 = vmatprep.subr.bf16.mxu0 0
        %1176 = vmatpush1.bf16.msra.mxu0 0
        %1177 = vmatprep.subr.bf16.mxu0 0
        %1178 = vmatpush1.bf16.msra.mxu0 0
        %1179 = vmatprep.subr.bf16.mxu0 0
        %1180 = vmatpush1.bf16.msra.mxu0 0
        %1181 = vmatprep.subr.bf16.mxu0 0
        %1182 = vmatpush1.bf16.msra.mxu0 0
        %1183 = vmatprep.subr.bf16.mxu0 0
        %1184 = vmatpush1.bf16.msra.mxu0 0
        %1185 = vmatprep.subr.bf16.mxu0 0
        %1186 = vmatpush1.bf16.msra.mxu0 0
        %1187 = vmatprep.subr.bf16.mxu0 0
        %1188 = vmatpush1.bf16.msra.mxu0 0
        %1189 = vmatprep.subr.bf16.mxu0 0
        %1190 = vmatpush1.bf16.msra.mxu0 0
        %1191 = vmatprep.subr.bf16.mxu0 0
        %1192 = vmatpush1.bf16.msra.mxu0 0
        %1193 = vmatprep.subr.bf16.mxu0 0
        %1194 = vmatpush1.bf16.msra.mxu0 0
        %1195 = vmatprep.subr.bf16.mxu0 0
        %1196 = vmatpush1.bf16.msra.mxu0 0
        %1197 = vmatprep.subr.bf16.mxu0 0
        %1198 = vmatpush1.bf16.msra.mxu0 0
        %1199 = vmatprep.mubr.bf16.mxu0 0
        %1200 = vmatmul.mubr.bf16.gmra.mrb[0].mxu0 %v1162
        %v1201 = vpop.f32.mrb[0].mxu0
        %v1202 = vadd.f32 0.0, %v1201
        %v1203 = vpop.f32.mrb[0].mxu0
        %v1204 = vpop.f32.mrb[0].mxu0
        %v1205 = vpop.f32.mrb[0].mxu0
        %1206 = vdwg.mxu0
        %v1207 = vadd.f32 %v1154, %v1202
        %s1208 = scalar_lea.vmem [#allocation7], 12
        %v1209 = vld [vmem:[%s1208] sm:$0xf]
        %v1211 = vsel %vm642, %v1063, 0
        %v1214 = vsel %vm878, %v1209, 0
        %1216 = vmatprep.subr.bf16.mxu0 0
        %1217 = vmatpush1.bf16.msra.mxu0 %v1214
        %1218 = vmatprep.subr.bf16.mxu0 0
        %1219 = vmatpush1.bf16.msra.mxu0 0
        %1220 = vmatprep.subr.bf16.mxu0 0
        %1221 = vmatpush1.bf16.msra.mxu0 0
        %1222 = vmatprep.subr.bf16.mxu0 0
        %1223 = vmatpush1.bf16.msra.mxu0 0
        %1224 = vmatprep.subr.bf16.mxu0 0
        %1225 = vmatpush1.bf16.msra.mxu0 0
        %1226 = vmatprep.subr.bf16.mxu0 0
        %1227 = vmatpush1.bf16.msra.mxu0 0
        %1228 = vmatprep.subr.bf16.mxu0 0
        %1229 = vmatpush1.bf16.msra.mxu0 0
        %1230 = vmatprep.subr.bf16.mxu0 0
        %1231 = vmatpush1.bf16.msra.mxu0 0
        %1232 = vmatprep.subr.bf16.mxu0 0
        %1233 = vmatpush1.bf16.msra.mxu0 0
        %1234 = vmatprep.subr.bf16.mxu0 0
        %1235 = vmatpush1.bf16.msra.mxu0 0
        %1236 = vmatprep.subr.bf16.mxu0 0
        %1237 = vmatpush1.bf16.msra.mxu0 0
        %1238 = vmatprep.subr.bf16.mxu0 0
        %1239 = vmatpush1.bf16.msra.mxu0 0
        %1240 = vmatprep.subr.bf16.mxu0 0
        %1241 = vmatpush1.bf16.msra.mxu0 0
        %1242 = vmatprep.subr.bf16.mxu0 0
        %1243 = vmatpush1.bf16.msra.mxu0 0
        %1244 = vmatprep.subr.bf16.mxu0 0
        %1245 = vmatpush1.bf16.msra.mxu0 0
        %1246 = vmatprep.subr.bf16.mxu0 0
        %1247 = vmatpush1.bf16.msra.mxu0 0
        %1248 = vmatprep.mubr.bf16.mxu0 0
        %1249 = vmatmul.mubr.bf16.gmra.mrb[0].mxu0 %v1211
        %v1250 = vpop.f32.mrb[0].mxu0
        %v1251 = vadd.f32 0.0, %v1250
        %v1252 = vpop.f32.mrb[0].mxu0
        %v1253 = vpop.f32.mrb[0].mxu0
        %v1254 = vpop.f32.mrb[0].mxu0
        %1255 = vdwg.mxu0
        %v1256 = vadd.f32 %v1207, %v1251
        %v1257 = vld [vmem:[%s5] sm:$0x1]
        %v1259 = vlaneseq
        %v1260 = vshrl.u32 %v1259, 7
        %v1261 = vsub.s32 0, %v1260
        %v1262 = vrot.slane %v1257, %v1261
        %v1264 = vadd.f32 %v1256, %v1262
        %v1265 = vadd.f32 %v629, %v1264
        %v1266 = vld [vmem:[%s6] sm:$0x1]
        %v1267 = vld [vmem:[%s7] sm:$0x1]
        %vm1268 = vcmask 261120
        %v1269 = vsel %vm1268, %v1265, 0.0
        %1270 = vadd.xlane.f32.xlu0 %v1269
        %v1271 = vpop.xlane.xlu0 %1270
        %v1272 = vrcp.pop 32.0
        %v1273 = vmul.f32 %v1271, %v1272
        %v1274 = vsub.f32 %v1265, %v1273
        %v1275 = vmul.f32 %v1274, %v1274
        %v1276 = vsel %vm1268, %v1275, 0.0
        %1277 = vadd.xlane.f32.xlu0 %v1276
        %v1278 = vpop.xlane.xlu0 %1277
        %v1279 = vmul.f32 %v1278, %v1272
        %v1280 = vadd.f32 %v1279, 1e-05
        %v1281 = vrsqrt.pop %v1280
        %v1282 = vmul.f32 %v1274, %v1281
        %v1284 = vlaneseq
        %v1285 = vshrl.u32 %v1284, 7
        %v1286 = vsub.s32 0, %v1285
        %v1287 = vrot.slane %v1266, %v1286
        %v1289 = vmul.f32 %v1282, %v1287
        %v1291 = vlaneseq
        %v1292 = vshrl.u32 %v1291, 7
        %v1293 = vsub.s32 0, %v1292
        %v1294 = vrot.slane %v1267, %v1293
        %v1296 = vadd.f32 %v1289, %v1294
        %v1297 = vpack.c.bf16 %v1296, %v1296
        %v1298 = vld [vmem:[#allocation8] sm:$0xf]
        %v1299 = vld [vmem:[#allocation8 + $0x4] sm:$0xf]
        %v1300 = vld [vmem:[#allocation8 + $0x8] sm:$0xf]
        %v1301 = vld [vmem:[#allocation8 + $0xc] sm:$0xf]
        %v1302 = vld [vmem:[%s9] sm:$0x1]
        %v1304 = vlaneseq
        %v1305 = vshrl.u32 %v1304, 7
        %v1306 = vsub.s32 0, %v1305
        %v1307 = vrot.slane %v1302, %v1306
        %v1313 = vunpack.c.l.b16 %v1298
        %v1314 = vunpack.c.l.b16 %v1299
        %v1315 = vunpack.c.l.b16 %v1300
        %v1316 = vunpack.c.l.b16 %v1301
        %v1317 = vpack.c.b16 %v1314, %v1313
        %v1318 = vpack.c.b16 %v1316, %v1315
        %v1322 = vsel %vm1268, %v1297, 0
        %1324 = vmatprep.subr.bf16.mxu0 0
        %1325 = vmatpush1.bf16.msra.mxu0 %v1317
        %1326 = vmatprep.subr.bf16.mxu0 0
        %1327 = vmatpush1.bf16.msra.mxu0 %v1318
        %1328 = vmatprep.subr.bf16.mxu0 0
        %1329 = vmatpush1.bf16.msra.mxu0 0
        %1330 = vmatprep.subr.bf16.mxu0 0
        %1331 = vmatpush1.bf16.msra.mxu0 0
        %1332 = vmatprep.subr.bf16.mxu0 0
        %1333 = vmatpush1.bf16.msra.mxu0 0
        %1334 = vmatprep.subr.bf16.mxu0 0
        %1335 = vmatpush1.bf16.msra.mxu0 0
        %1336 = vmatprep.subr.bf16.mxu0 0
        %1337 = vmatpush1.bf16.msra.mxu0 0
        %1338 = vmatprep.subr.bf16.mxu0 0
        %1339 = vmatpush1.bf16.msra.mxu0 0
        %1340 = vmatprep.subr.bf16.mxu0 0
        %1341 = vmatpush1.bf16.msra.mxu0 0
        %1342 = vmatprep.subr.bf16.mxu0 0
        %1343 = vmatpush1.bf16.msra.mxu0 0
        %1344 = vmatprep.subr.bf16.mxu0 0
        %1345 = vmatpush1.bf16.msra.mxu0 0
        %1346 = vmatprep.subr.bf16.mxu0 0
        %1347 = vmatpush1.bf16.msra.mxu0 0
        %1348 = vmatprep.subr.bf16.mxu0 0
        %1349 = vmatpush1.bf16.msra.mxu0 0
        %1350 = vmatprep.subr.bf16.mxu0 0
        %1351 = vmatpush1.bf16.msra.mxu0 0
        %1352 = vmatprep.subr.bf16.mxu0 0
        %1353 = vmatpush1.bf16.msra.mxu0 0
        %1354 = vmatprep.subr.bf16.mxu0 0
        %1355 = vmatpush1.bf16.msra.mxu0 0
        %1356 = vmatprep.mubr.bf16.mxu0 0
        %1357 = vmatmul.mubr.bf16.gmra.mrb[0].mxu0 %v1322
        %v1358 = vpop.f32.mrb[0].mxu0
        %v1359 = vadd.f32 %v1307, %v1358
        %v1360 = vpop.f32.mrb[0].mxu0
        %v1361 = vpop.f32.mrb[0].mxu0
        %v1362 = vpop.f32.mrb[0].mxu0
        %1363 = vdwg.mxu0
        %v1364 = vmax.f32 %v1359, 0.0
        %v1365 = vpack.c.bf16 %v1364, %v1364
        %v1366 = vld [vmem:[%s10] sm:$0xf]
        %v1367 = vld [vmem:[%s10 + $0x4] sm:$0xf]
        %v1368 = vld [vmem:[%s10 + $0x8] sm:$0xf]
        %v1369 = vld [vmem:[%s10 + $0xc] sm:$0xf]
        %v1370 = vld [vmem:[%s10 + $0x10] sm:$0xf]
        %v1371 = vld [vmem:[%s10 + $0x14] sm:$0xf]
        %v1372 = vld [vmem:[%s10 + $0x18] sm:$0xf]
        %v1373 = vld [vmem:[%s10 + $0x1c] sm:$0xf]
        %v1374 = vld [vmem:[%s11] sm:$0x1]
        %v1376 = vlaneseq
        %v1377 = vshrl.u32 %v1376, 7
        %v1378 = vsub.s32 0, %v1377
        %v1379 = vrot.slane %v1374, %v1378
        %v1389 = vunpack.c.l.b16 %v1366
        %v1390 = vunpack.c.l.b16 %v1367
        %v1391 = vunpack.c.l.b16 %v1368
        %v1392 = vunpack.c.l.b16 %v1369
        %v1393 = vunpack.c.l.b16 %v1370
        %v1394 = vunpack.c.l.b16 %v1371
        %v1395 = vunpack.c.l.b16 %v1372
        %v1396 = vunpack.c.l.b16 %v1373
        %v1397 = vpack.c.b16 %v1390, %v1389
        %v1398 = vpack.c.b16 %v1392, %v1391
        %v1399 = vpack.c.b16 %v1394, %v1393
        %v1400 = vpack.c.b16 %v1396, %v1395
        %vm1405 = vcmask 523264
        %v1407 = vsel %vm1405, %v1365, 0
        %1409 = vmatprep.subr.bf16.mxu0 0
        %1410 = vmatpush1.bf16.msra.mxu0 %v1397
        %1411 = vmatprep.subr.bf16.mxu0 0
        %1412 = vmatpush1.bf16.msra.mxu0 %v1398
        %1413 = vmatprep.subr.bf16.mxu0 0
        %1414 = vmatpush1.bf16.msra.mxu0 %v1399
        %1415 = vmatprep.subr.bf16.mxu0 0
        %1416 = vmatpush1.bf16.msra.mxu0 %v1400
        %1417 = vmatprep.subr.bf16.mxu0 0
        %1418 = vmatpush1.bf16.msra.mxu0 0
        %1419 = vmatprep.subr.bf16.mxu0 0
        %1420 = vmatpush1.bf16.msra.mxu0 0
        %1421 = vmatprep.subr.bf16.mxu0 0
        %1422 = vmatpush1.bf16.msra.mxu0 0
        %1423 = vmatprep.subr.bf16.mxu0 0
        %1424 = vmatpush1.bf16.msra.mxu0 0
        %1425 = vmatprep.subr.bf16.mxu0 0
        %1426 = vmatpush1.bf16.msra.mxu0 0
        %1427 = vmatprep.subr.bf16.mxu0 0
        %1428 = vmatpush1.bf16.msra.mxu0 0
        %1429 = vmatprep.subr.bf16.mxu0 0
        %1430 = vmatpush1.bf16.msra.mxu0 0
        %1431 = vmatprep.subr.bf16.mxu0 0
        %1432 = vmatpush1.bf16.msra.mxu0 0
        %1433 = vmatprep.subr.bf16.mxu0 0
        %1434 = vmatpush1.bf16.msra.mxu0 0
        %1435 = vmatprep.subr.bf16.mxu0 0
        %1436 = vmatpush1.bf16.msra.mxu0 0
        %1437 = vmatprep.subr.bf16.mxu0 0
        %1438 = vmatpush1.bf16.msra.mxu0 0
        %1439 = vmatprep.subr.bf16.mxu0 0
        %1440 = vmatpush1.bf16.msra.mxu0 0
        %1441 = vmatprep.mubr.bf16.mxu0 0
        %1442 = vmatmul.mubr.bf16.gmra.mrb[0].mxu0 %v1407
        %v1443 = vpop.f32.mrb[0].mxu0
        %v1444 = vadd.f32 %v1379, %v1443
        %v1445 = vpop.f32.mrb[0].mxu0
        %v1446 = vpop.f32.mrb[0].mxu0
        %v1447 = vpop.f32.mrb[0].mxu0
        %1448 = vdwg.mxu0
        %v1449 = vadd.f32 %v1296, %v1444
        %v1450 = vld [vmem:[%s12] sm:$0x1]
        %v1451 = vld [vmem:[%s13] sm:$0x1]
        %v1452 = vsel %vm1268, %v1449, 0.0
        %1453 = vadd.xlane.f32.xlu0 %v1452
        %v1454 = vpop.xlane.xlu0 %1453
        %v1455 = vmul.f32 %v1454, %v1272
        %v1456 = vsub.f32 %v1449, %v1455
        %v1457 = vmul.f32 %v1456, %v1456
        %v1458 = vsel %vm1268, %v1457, 0.0
        %1459 = vadd.xlane.f32.xlu0 %v1458
        %v1460 = vpop.xlane.xlu0 %1459
        %v1461 = vmul.f32 %v1460, %v1272
        %v1462 = vadd.f32 %v1461, 1e-05
        %v1463 = vrsqrt.pop %v1462
        %v1464 = vmul.f32 %v1456, %v1463
        %v1466 = vlaneseq
        %v1467 = vshrl.u32 %v1466, 7
        %v1468 = vsub.s32 0, %v1467
        %v1469 = vrot.slane %v1450, %v1468
        %v1471 = vmul.f32 %v1464, %v1469
        %v1473 = vlaneseq
        %v1474 = vshrl.u32 %v1473, 7
        %v1475 = vsub.s32 0, %v1474
        %v1476 = vrot.slane %v1451, %v1475
        %v1478 = vadd.f32 %v1471, %v1476
        %1479 = vst.msk [vmem:[%s612] sm:$0xff] %vm1268, %v1478
        %s1480 = sand.u32 %s375, 1
        %s1481 = scalar_lea.sflag [#allocation4], %s1480
        %s1482 = sand.u32 %s375, 1
        %s1483 = smul.addr %s1482, 8
        %s1484 = scalar_lea.vmem [#allocation10], %s1483
        // Predicated region
        $region93: #{tpu_custom_call.1} parent=75 // pred_check
          %p1485 = pneg %p385
        $region94: #{tpu_custom_call.1} parent=75 // pred_check_branch
          %1487 = sbr.rel (%p1485) target = $region96
        $region95: #{tpu_custom_call.1} parent=75 // pred_region
          %s1489 = ssub.s32 128, 128
          %1490 = vsyncadd %s1481, %s1489
          %s1491 = sadd.s32 %s40, %s39
          %s1492 = smul.addr %s1491, 128
          %s1493 = scalar_lea.hbm %s14, %s1492
          %s1495 = sshll.u32 %s1484, 4
          %s1496 = int_to_ptr.vmem [resolvable:$true] %s1495
          %1498 = dma.vmem_to_hbm [thread:$0]  %s1496, 128, %s1493, %s1481
        $region96: #{tpu_custom_call.1} parent=75 // pred_fallthru
          _
      $region76: #{tpu_custom_call.1} parent=5 // pred_fallthru
        _
      %p1499 = scmp.le.s32.totalorder 2, %s30
      // Predicated region
      $region97: #{tpu_custom_call.1} parent=5 // pred_check
        %p1500 = pneg %p1499
      $region98: #{tpu_custom_call.1} parent=5 // pred_check_branch
        %1502 = sbr.rel (%p1500) target = $region100
      $region99: #{tpu_custom_call.1} parent=5 // pred_region
        %s1503 = ssub.s32 %s30, 2
        // Predicated region
        $region101: #{tpu_custom_call.1} parent=99 // pred_check
          %p1504 = pneg %p391
        $region102: #{tpu_custom_call.1} parent=99 // pred_check_branch
          %1506 = sbr.rel (%p1504) target = $region104
        $region103: #{tpu_custom_call.1} parent=99 // pred_region
          %s1507 = sand.u32 %s376, 1
          %s1508 = scalar_lea.sflag [#allocation4], %s1507
          %s1509 = sand.u32 %s376, 1
          %s1510 = smul.addr %s1509, 8
          %s1511 = scalar_lea.vmem [#allocation10], %s1510
          %1512 = dma.done %s1508, 128
        $region104: #{tpu_custom_call.1} parent=99 // pred_fallthru
          _
      $region100: #{tpu_custom_call.1} parent=5 // pred_fallthru
        _
    $region6: #{tpu_custom_call.1} parent=1 // loop_footer
      %s34 = sadd.s32 1, %s30
    $region7: #{tpu_custom_call.1} parent=1 // loop_footer_branch
      %29 = sbr.rel target = $region3
    $region8: #{tpu_custom_call.1} parent=1 // loop_exit
      _
    %1513 = vsyncpa [#allocation3], 1
    %s1514 = scalar_lea.sflag [#allocation3], 1
    %1515 = vsyncpa %s1514, 1
    %1516 = vsyncpa [#allocation6], 1
    %s1517 = scalar_lea.sflag [#allocation6], 1
    %1518 = vsyncpa %s1517, 1
    %1519 = vsyncpa [#allocation9], 1
    %1520 = vsyncpa [#allocation4], 1
    %s1521 = scalar_lea.sflag [#allocation4], 1
    %1522 = vsyncpa %s1521, 1

</llo_original>
